<compile_context>
chip_gen: v6e
topology: v6e:2x2x1
jax: 0.10.0
libtpu: 0.0.40
codegen_flags: <defaults>
</compile_context>

<pallas_src>
import functools

import jax
import jax.numpy as jnp
from jax.experimental import pallas as pl
from jax.experimental.pallas import tpu as pltpu

LAMBDA_DIRECTION = 1.0
LAMBDA_L1 = 10.0

# CLIP preprocessing constants (shared by ViT-B/32 and RN50 preprocess).
_CLIP_MEAN = jnp.array([0.48145466, 0.4578275, 0.40821073], dtype=jnp.float32)
_CLIP_STD = jnp.array([0.26862954, 0.26130258, 0.27577711], dtype=jnp.float32)

_LOSS_LANES = 128                        # lane-dense loss output width
_VMEM_LIMIT = 48 * 1024 * 1024           # safe on v5e/v6e (128 MiB) and v7x (64 MiB)
_WEIGHT_BLOCK_BUDGET = 16 * 1024 * 1024  # double-buffered bf16 weight blocks

# Multiples of 128, largest first; includes 3072 (divides ViT-B/32's F = 150528).
_TK_CANDIDATES = (12288, 8192, 6144, 4096, 3072, 2048, 1536, 1024, 768, 512, 384,
                  256, 128)


# --------------------------------------------------------------------------- #
# Kernels
# --------------------------------------------------------------------------- #
def _feat_accum_kernel(x_ref, w_ref, f_ref, acc_ref):
    """K-tiled (2B, tk) @ (tk, tn) -> f32 accumulator; write-out on last K step."""
    k = pl.program_id(1)

    @pl.when(k == 0)
    def _():
        acc_ref[...] = jnp.zeros_like(acc_ref)

    # bf16 x bf16 -> f32 accumulate on the MXU.
    acc_ref[...] += jnp.dot(x_ref[...], w_ref[...],
                            preferred_element_type=jnp.float32)

    @pl.when(k == pl.num_programs(1) - 1)
    def _():
        f_ref[...] = acc_ref[...]


def _feat_single_kernel(x_ref, w_ref, f_ref):
    """Small-problem fast path: whole K in one shot, no accumulator / pl.when."""
    f_ref[...] = jnp.dot(x_ref[...], w_ref[...],
                         preferred_element_type=jnp.float32)


def _clip_loss_kernel(feats_ref, loss_ref, *, batch, lambda_l1, lambda_direction):
    """L1 + cosine-direction loss on the (2B, D) feature differences."""
    feats = feats_ref[...]                        # (2B, D) f32
    content_d = feats[:batch, :]                  # enc(gray_content) - enc(color_content)
    style_d = feats[batch:, :]                    # .detach() in torch; same forward value

    # torch.nn.L1Loss(): mean |content_d - style_d| over all elements -> scalar.
    l1 = jnp.mean(jnp.abs(content_d - style_d))

    # DirectionLoss('cosine'): 1 - CosineSimilarity(dim=1)(content_d, style_d)
    # PyTorch clamps the PRODUCT of norms with eps = 1e-8; exact division
    # (epilogue-only, perf-irrelevant, numerics-relevant).
    dot = jnp.sum(content_d * style_d, axis=-1, keepdims=True)
    n_c = jnp.sqrt(jnp.sum(content_d * content_d, axis=-1, keepdims=True))
    n_s = jnp.sqrt(jnp.sum(style_d * style_d, axis=-1, keepdims=True))
    cos = dot / jnp.maximum(n_c * n_s, 1e-8)

    # clip_loss = lambda_l1 * L1 (scalar) + lambda_direction * (1 - cos) -> (B, 1)
    per_row = lambda_l1 * l1 + lambda_direction * (1.0 - cos)
    # Lane-dense store (masked (B,1) stores are slow); wrapper slices [:, 0].
    loss_ref[...] = jnp.broadcast_to(per_row, loss_ref.shape)


# --------------------------------------------------------------------------- #
# Tiling helpers
# --------------------------------------------------------------------------- #
def _pick_tn(D):
    """Prefer >=2 lane-aligned column blocks so the leading grid axis is a useful
    'parallel' dimension (both TensorCores on v7x); else keep the full D."""
    for cand in (256, 128):
        if D % cand == 0 and D // cand >= 2:
            return cand
    return D


def _pick_tk(F, max_tk):
    """Largest K tile under the VMEM budget, preferring exact divisors of F
    (no padding pass over the weight).  Never falls back to tk = F."""
    for cand in _TK_CANDIDATES:
        if cand <= max_tk and F % cand == 0:
            return cand, F
    tk = max(128, min(max_tk, 2048))
    f_pad = pl.cdiv(F, tk) * tk
    return tk, f_pad


# --------------------------------------------------------------------------- #
# pallas_call wrappers
# --------------------------------------------------------------------------- #
def _features_single(x, w, B, F, D, tn, num_n):
    return pl.pallas_call(
        _feat_single_kernel,
        out_shape=jax.ShapeDtypeStruct((2 * B, D), jnp.float32),
        grid_spec=pltpu.PrefetchScalarGridSpec(
            num_scalar_prefetch=0,
            grid=(num_n,),
            in_specs=[
                pl.BlockSpec((2 * B, F), lambda n: (0, 0)),    # diff activations
                pl.BlockSpec((F, tn), lambda n: (0, n)),       # weight column block
            ],
            out_specs=pl.BlockSpec((2 * B, tn), lambda n: (0, n)),
        ),
        compiler_params=pltpu.CompilerParams(
            dimension_semantics=("parallel",),
            vmem_limit_bytes=_VMEM_LIMIT,
        ),
    )(x, w)


def _features_accum(x, w, B, F_pad, D, tk, tn, num_n):
    num_k = F_pad // tk
    return pl.pallas_call(
        _feat_accum_kernel,
        out_shape=jax.ShapeDtypeStruct((2 * B, D), jnp.float32),
        grid_spec=pltpu.PrefetchScalarGridSpec(
            num_scalar_prefetch=0,
            grid=(num_n, num_k),                               # reduction axis last
            in_specs=[
                pl.BlockSpec((2 * B, tk), lambda n, k: (0, k)),  # diff activations
                pl.BlockSpec((tk, tn), lambda n, k: (k, n)),     # weight block
            ],
            out_specs=pl.BlockSpec((2 * B, tn), lambda n, k: (0, n)),
            scratch_shapes=[pltpu.VMEM((2 * B, tn), jnp.float32)],
        ),
        compiler_params=pltpu.CompilerParams(
            dimension_semantics=("parallel", "arbitrary"),
            vmem_limit_bytes=_VMEM_LIMIT,
        ),
    )(x, w)


def clip_loss(color_content, gray_content, gray_style, color_style, weight,
              lambda_direction=LAMBDA_DIRECTION, lambda_l1=LAMBDA_L1):
    """Forward pass of CLIPLoss with a synthetic linear encoder."""
    B, C, H, W = color_content.shape
    F = C * H * W
    D = weight.shape[1]

    # ---- preprocess + pre-difference (touches only activations, ~4B*F elems) ----
    # Normalize(mean=[-1,-1,-1], std=[2,2,2]):  y = (x + 1) / 2
    # then CLIP Normalize(mean, std):           z = y*(0.5/s) + (0.5 - m)/s  per channel.
    # compute_image_direction(src, tgt) = enc(tgt) - enc(src); with a linear encoder
    # the per-channel bias cancels in the difference, so only the scale is applied.
    # TODO(synk): Resize / CenterCrop (clip_preprocess.transforms[:2]) are not
    # implemented; inputs are assumed to already be at the encoder resolution.
    scale_c = (0.5 / _CLIP_STD).reshape(1, C, 1, 1)
    d_content = (gray_content - color_content) * scale_c     # pre-image of content_d
    d_style = (gray_style - color_style) * scale_c           # pre-image of style_d (detached in torch)
    x = jnp.concatenate([d_content.reshape(B, F),
                         d_style.reshape(B, F)], axis=0).astype(jnp.bfloat16)  # (2B, F)

    # bf16 weight for the MXU; pass a pre-cast bf16 weight to hoist this full-(F,D)
    # cast out of the per-call path (see __main__).
    w = weight if weight.dtype == jnp.bfloat16 else weight.astype(jnp.bfloat16)

    tn = _pick_tn(D)
    num_n = D // tn
    # tk such that a double-buffered bf16 (tk, tn) weight block fits the budget.
    max_tk = max(128, (_WEIGHT_BLOCK_BUDGET // (4 * tn)) // 128 * 128)

    if F <= max_tk:
        # Small-problem fast path: whole K in one grid step, no accumulator.
        feats = _features_single(x, w, B, F, D, tn, num_n)
    else:
        tk, f_pad = _pick_tk(F, max_tk)
        if f_pad != F:
            # TODO(synk): last-resort zero-pad for F with no suitable divisor; costs
            # one extra pass over the weight but keeps VMEM bounded and results exact.
            x = jnp.pad(x, ((0, 0), (0, f_pad - F)))
            w = jnp.pad(w, ((0, f_pad - F), (0, 0)))
        feats = _features_accum(x, w, B, f_pad, D, tk, tn, num_n)

    # Tiny loss epilogue on the (2B, D) feature differences.
    loss_kernel = functools.partial(_clip_loss_kernel,
                                    batch=B,
                                    lambda_l1=float(lambda_l1),
                                    lambda_direction=float(lambda_direction))
    loss_lanes = pl.pallas_call(
        loss_kernel,
        out_shape=jax.ShapeDtypeStruct((B, _LOSS_LANES), jnp.float32),
    )(feats)

    # PyTorch result: scalar (L1 term) + (B,) cosine term broadcasts to shape (B,).
    return loss_lanes[:, 0]


if __name__ == "__main__":
    key = jax.random.PRNGKey(0)
    B, C, H, W, D = 2, 3, 32, 32, 128
    k1, k2, k3, k4, kw = jax.random.split(key, 5)

    color_content = jax.random.uniform(k1, (B, C, H, W), jnp.float32, -1.0, 1.0)
    gray_content = jax.random.uniform(k2, (B, C, H, W), jnp.float32, -1.0, 1.0)
    gray_style = jax.random.uniform(k3, (B, C, H, W), jnp.float32, -1.0, 1.0)
    color_style = jax.random.uniform(k4, (B, C, H, W), jnp.float32, -1.0, 1.0)

    # Deterministic synthetic encoder weight (stands in for CLIP encode_image),
    # pre-cast to bf16 ONCE so the per-call path never touches the f32 weight.
    # TODO(synk): full ViT-B/32 transformer / RN50 CNN encoders are not ported;
    # model_cnn (RN50 path) is unused by forward() and therefore omitted.
    weight = (jax.random.normal(kw, (C * H * W, D), jnp.float32)
              * 0.02).astype(jnp.bfloat16)

    loss = clip_loss(color_content, gray_content, gray_style, color_style, weight)
    jax.block_until_ready(loss)
    print("KERNEL_OK")
</pallas_src>

<mosaic_0001>
module attributes {stable_mosaic.version = 11 : i64} {
  func.func @_feat_single_kernel(%arg0: i32, %arg1: memref<4x3072xbf16, #tpu.memory_space<vmem>>, %arg2: memref<3072x128xbf16, #tpu.memory_space<vmem>>, %arg3: memref<4x128xf32, #tpu.memory_space<vmem>>) attributes {dimension_semantics = [#tpu.dimension_semantics<parallel>], iteration_bounds = array<i64: 1>, scalar_prefetch = 0 : i64, scratch_operands = 0 : i64, tpu.core_type = #tpu.core_type<tc>, window_params = [{pipeline_mode = #tpu.pipeline_mode<synchronous>, transform_indices = @transform_0, window_bounds = array<i64: 4, 3072>}, {transform_indices = @transform_1, window_bounds = array<i64: 3072, 128>}, {transform_indices = @transform_2, window_bounds = array<i64: 4, 128>}]} {
    %c0 = arith.constant 0 : index
    %c0_0 = arith.constant 0 : index
    %0 = vector.load %arg1[%c0, %c0_0] : memref<4x3072xbf16, #tpu.memory_space<vmem>>, vector<4x3072xbf16>
    %c0_1 = arith.constant 0 : index
    %c0_2 = arith.constant 0 : index
    %1 = vector.load %arg2[%c0_1, %c0_2] : memref<3072x128xbf16, #tpu.memory_space<vmem>>, vector<3072x128xbf16>
    %cst = arith.constant dense<0.000000e+00> : vector<4x128xf32>
    %2 = tpu.matmul %0, %1, %cst {dimension_numbers = #tpu.dot_dimension_numbers<[1], [0], [0], [1], [0, 0, 1, 1], [], []>} : vector<4x3072xbf16>, vector<3072x128xbf16>, vector<4x128xf32> -> vector<4x128xf32>
    %c0_3 = arith.constant 0 : index
    %c0_4 = arith.constant 0 : index
    %3 = vector.load %arg3[%c0_3, %c0_4] : memref<4x128xf32, #tpu.memory_space<vmem>>, vector<4x128xf32>
    tpu.vector_store %arg3[%c0_3, %c0_4], %2 {strides = array<i32>} : memref<4x128xf32, #tpu.memory_space<vmem>>, vector<4x128xf32>,
    return
  }
  func.func @transform_0(%arg0: i32) -> (i32, i32) {
    %c0_i32 = arith.constant 0 : i32
    %c0_i32_0 = arith.constant 0 : i32
    %c0_i32_1 = arith.constant 0 : i32
    return %c0_i32, %c0_i32_0 : i32, i32
  }
  func.func @transform_1(%arg0: i32) -> (i32, i32) {
    %c0_i32 = arith.constant 0 : i32
    %c0_i32_0 = arith.constant 0 : i32
    return %c0_i32, %arg0 : i32, i32
  }
  func.func @transform_2(%arg0: i32) -> (i32, i32) {
    %c0_i32 = arith.constant 0 : i32
    %c0_i32_0 = arith.constant 0 : i32
    return %c0_i32, %arg0 : i32, i32
  }
}

</mosaic_0001>

<llo_original>
// kernel: tpu_custom_call.1
$region0: #{tpu_custom_call.1}
  #allocation0 [shape = 'u32[]', space=smem, size = 0x4, offset = 0x4, fixed_abs, tag = 'smem constant byte address 0x4 - core index']
  #allocation1 [shape = 'u32[144,128]{1,0:T(1,128)}', space=vmem, size = 0x12000, scoped, tag = 'internal scratch']
  %s0 = inlined_call_operand.hbm [shape: bf16[4,3072], index: 0, kind: input, shape index: {}]
  %s1 = inlined_call_operand.hbm [shape: bf16[3072,128], index: 1, kind: input, shape index: {}]
  %s2 = inlined_call_operand.hbm [shape: f32[4,128], index: 2, kind: output, shape index: {}]
  %s3 = sld [smem:[#allocation0]]
  $region26: #{tpu_custom_call.1} parent=0
    _
  %s5 = ssub.s32 1, %s3
  %s6 = scalar_select 0, %s5, %s3
  $region1: #{tpu_custom_call.1} parent=0
    #allocation2 [shape = 'u8[24576]{0}', space=vmem, size = 0x6000, scoped, tag = 'input window, operand 0, single buffered']
    #allocation3 [shape = 's32[1]{0}', space=sflag, size = 0x4, scoped, tag = 'scoped memory for tpu_custom_call.1']
    #allocation4 [shape = 's32[1]{0}', space=sflag, size = 0x4, scoped, tag = 'scoped memory for tpu_custom_call.1']
    #allocation5 [shape = 'u8[786432]{0}', space=vmem, size = 0xc0000, scoped, tag = 'input window, operand 1, single buffered']
    #allocation6 [shape = 's32[1]{0}', space=sflag, size = 0x4, scoped, tag = 'scoped memory for tpu_custom_call.1']
    #allocation7 [shape = 'u8[2048]{0}', space=vmem, size = 0x800, scoped, tag = 'output window, operand 0, single buffered']
    %7 = vsyncpa [#allocation3], 0
    %8 = vsyncpa [#allocation6], 0
    %9 = vsyncpa [#allocation4], 0
    // Predicated region
    $region2: #{tpu_custom_call.1} parent=1 // pred_check
      _
    $region3: #{tpu_custom_call.1} parent=1 // pred_check_branch
      %11 = sbr.rel (0) target = $region5
    $region4: #{tpu_custom_call.1} parent=1 // pred_region
      %s13 = ssub.s32 768, 768
      %14 = vsyncadd [#allocation3], %s13
      %s16 = sshll.u32 [#allocation2], 4
      %s17 = int_to_ptr.vmem [resolvable:$true] %s16
      %19 = dma.hbm_to_vmem [thread:$0]  %s0, 768, %s17, [#allocation3]
    $region5: #{tpu_custom_call.1} parent=1 // pred_fallthru
      _
    // Predicated region
    $region6: #{tpu_custom_call.1} parent=1 // pred_check
      _
    $region7: #{tpu_custom_call.1} parent=1 // pred_check_branch
      %21 = sbr.rel (0) target = $region9
    $region8: #{tpu_custom_call.1} parent=1 // pred_region
      %s23 = ssub.s32 24576, 24576
      %24 = vsyncadd [#allocation6], %s23
      %s25 = sshll.u32 [#allocation5], 4
      %s26 = int_to_ptr.vmem [resolvable:$true] %s25
      %31 = dma.hbm_to_vmem [thread:$0]  %s1, 24576, %s26, [#allocation6], 64, 64, 4
    $region9: #{tpu_custom_call.1} parent=1 // pred_fallthru
      _
    // Predicated region
    $region10: #{tpu_custom_call.1} parent=1 // pred_check
      _
    $region11: #{tpu_custom_call.1} parent=1 // pred_check_branch
      %33 = sbr.rel (0) target = $region13
    $region12: #{tpu_custom_call.1} parent=1 // pred_region
      %34 = dma.done [#allocation3], 768
    $region13: #{tpu_custom_call.1} parent=1 // pred_fallthru
      _
    // Predicated region
    $region14: #{tpu_custom_call.1} parent=1 // pred_check
      _
    $region15: #{tpu_custom_call.1} parent=1 // pred_check_branch
      %36 = sbr.rel (0) target = $region17
    $region16: #{tpu_custom_call.1} parent=1 // pred_region
      %37 = dma.done [#allocation6], 24576
    $region17: #{tpu_custom_call.1} parent=1 // pred_fallthru
      _
    %v39 = vld [vmem:[#allocation2] sm:$0xff]
    %v40 = vld [vmem:[#allocation2 + $0x8] sm:$0xff]
    %v41 = vld [vmem:[#allocation2 + $0x10] sm:$0xff]
    %v42 = vld [vmem:[#allocation2 + $0x18] sm:$0xff]
    %v43 = vld [vmem:[#allocation2 + $0x20] sm:$0xff]
    %v44 = vld [vmem:[#allocation2 + $0x28] sm:$0xff]
    %v45 = vld [vmem:[#allocation5] sm:$0xf]
    %v46 = vld [vmem:[#allocation5 + $0x4] sm:$0xf]
    %v47 = vld [vmem:[#allocation5 + $0x8] sm:$0xf]
    %v48 = vld [vmem:[#allocation5 + $0xc] sm:$0xf]
    %v49 = vld [vmem:[#allocation5 + $0x10] sm:$0xf]
    %v50 = vld [vmem:[#allocation5 + $0x14] sm:$0xf]
    %v51 = vld [vmem:[#allocation5 + $0x18] sm:$0xf]
    %v52 = vld [vmem:[#allocation5 + $0x1c] sm:$0xf]
    %v53 = vld [vmem:[#allocation5 + $0x20] sm:$0xf]
    %v54 = vld [vmem:[#allocation5 + $0x24] sm:$0xf]
    %v55 = vld [vmem:[#allocation5 + $0x28] sm:$0xf]
    %v56 = vld [vmem:[#allocation5 + $0x2c] sm:$0xf]
    %v57 = vld [vmem:[#allocation5 + $0x30] sm:$0xf]
    %v58 = vld [vmem:[#allocation5 + $0x34] sm:$0xf]
    %v59 = vld [vmem:[#allocation5 + $0x38] sm:$0xf]
    %v60 = vld [vmem:[#allocation5 + $0x3c] sm:$0xf]
    %v61 = vld [vmem:[#allocation5 + $0x40] sm:$0xf]
    %v62 = vld [vmem:[#allocation5 + $0x44] sm:$0xf]
    %v63 = vld [vmem:[#allocation5 + $0x48] sm:$0xf]
    %v64 = vld [vmem:[#allocation5 + $0x4c] sm:$0xf]
    %v65 = vld [vmem:[#allocation5 + $0x50] sm:$0xf]
    %v66 = vld [vmem:[#allocation5 + $0x54] sm:$0xf]
    %v67 = vld [vmem:[#allocation5 + $0x58] sm:$0xf]
    %v68 = vld [vmem:[#allocation5 + $0x5c] sm:$0xf]
    %v69 = vld [vmem:[#allocation5 + $0x60] sm:$0xf]
    %v70 = vld [vmem:[#allocation5 + $0x64] sm:$0xf]
    %v71 = vld [vmem:[#allocation5 + $0x68] sm:$0xf]
    %v72 = vld [vmem:[#allocation5 + $0x6c] sm:$0xf]
    %v73 = vld [vmem:[#allocation5 + $0x70] sm:$0xf]
    %v74 = vld [vmem:[#allocation5 + $0x74] sm:$0xf]
    %v75 = vld [vmem:[#allocation5 + $0x78] sm:$0xf]
    %v76 = vld [vmem:[#allocation5 + $0x7c] sm:$0xf]
    %v77 = vld [vmem:[#allocation5 + $0x80] sm:$0xf]
    %v78 = vld [vmem:[#allocation5 + $0x84] sm:$0xf]
    %v79 = vld [vmem:[#allocation5 + $0x88] sm:$0xf]
    %v80 = vld [vmem:[#allocation5 + $0x8c] sm:$0xf]
    %v81 = vld [vmem:[#allocation5 + $0x90] sm:$0xf]
    %v82 = vld [vmem:[#allocation5 + $0x94] sm:$0xf]
    %v83 = vld [vmem:[#allocation5 + $0x98] sm:$0xf]
    %v84 = vld [vmem:[#allocation5 + $0x9c] sm:$0xf]
    %v85 = vld [vmem:[#allocation5 + $0xa0] sm:$0xf]
    %v86 = vld [vmem:[#allocation5 + $0xa4] sm:$0xf]
    %v87 = vld [vmem:[#allocation5 + $0xa8] sm:$0xf]
    %v88 = vld [vmem:[#allocation5 + $0xac] sm:$0xf]
    %v89 = vld [vmem:[#allocation5 + $0xb0] sm:$0xf]
    %v90 = vld [vmem:[#allocation5 + $0xb4] sm:$0xf]
    %v91 = vld [vmem:[#allocation5 + $0xb8] sm:$0xf]
    %v92 = vld [vmem:[#allocation5 + $0xbc] sm:$0xf]
    %v93 = vld [vmem:[#allocation5 + $0xc0] sm:$0xf]
    %v94 = vld [vmem:[#allocation5 + $0xc4] sm:$0xf]
    %v95 = vld [vmem:[#allocation5 + $0xc8] sm:$0xf]
    %v96 = vld [vmem:[#allocation5 + $0xcc] sm:$0xf]
    %v97 = vld [vmem:[#allocation5 + $0xd0] sm:$0xf]
    %v98 = vld [vmem:[#allocation5 + $0xd4] sm:$0xf]
    %v99 = vld [vmem:[#allocation5 + $0xd8] sm:$0xf]
    %v100 = vld [vmem:[#allocation5 + $0xdc] sm:$0xf]
    %v101 = vld [vmem:[#allocation5 + $0xe0] sm:$0xf]
    %v102 = vld [vmem:[#allocation5 + $0xe4] sm:$0xf]
    %v103 = vld [vmem:[#allocation5 + $0xe8] sm:$0xf]
    %v104 = vld [vmem:[#allocation5 + $0xec] sm:$0xf]
    %v105 = vld [vmem:[#allocation5 + $0xf0] sm:$0xf]
    %v106 = vld [vmem:[#allocation5 + $0xf4] sm:$0xf]
    %v107 = vld [vmem:[#allocation5 + $0xf8] sm:$0xf]
    %v108 = vld [vmem:[#allocation5 + $0xfc] sm:$0xf]
    %v109 = vld [vmem:[#allocation5 + $0x100] sm:$0xf]
    %v110 = vld [vmem:[#allocation5 + $0x104] sm:$0xf]
    %v111 = vld [vmem:[#allocation5 + $0x108] sm:$0xf]
    %v112 = vld [vmem:[#allocation5 + $0x10c] sm:$0xf]
    %v113 = vld [vmem:[#allocation5 + $0x110] sm:$0xf]
    %v114 = vld [vmem:[#allocation5 + $0x114] sm:$0xf]
    %v115 = vld [vmem:[#allocation5 + $0x118] sm:$0xf]
    %v116 = vld [vmem:[#allocation5 + $0x11c] sm:$0xf]
    %v117 = vld [vmem:[#allocation5 + $0x120] sm:$0xf]
    %v118 = vld [vmem:[#allocation5 + $0x124] sm:$0xf]
    %v119 = vld [vmem:[#allocation5 + $0x128] sm:$0xf]
    %v120 = vld [vmem:[#allocation5 + $0x12c] sm:$0xf]
    %v121 = vld [vmem:[#allocation5 + $0x130] sm:$0xf]
    %v122 = vld [vmem:[#allocation5 + $0x134] sm:$0xf]
    %v123 = vld [vmem:[#allocation5 + $0x138] sm:$0xf]
    %v124 = vld [vmem:[#allocation5 + $0x13c] sm:$0xf]
    %v125 = vld [vmem:[#allocation5 + $0x140] sm:$0xf]
    %v126 = vld [vmem:[#allocation5 + $0x144] sm:$0xf]
    %v127 = vld [vmem:[#allocation5 + $0x148] sm:$0xf]
    %v128 = vld [vmem:[#allocation5 + $0x14c] sm:$0xf]
    %v129 = vld [vmem:[#allocation5 + $0x150] sm:$0xf]
    %v130 = vld [vmem:[#allocation5 + $0x154] sm:$0xf]
    %v131 = vld [vmem:[#allocation5 + $0x158] sm:$0xf]
    %v132 = vld [vmem:[#allocation5 + $0x15c] sm:$0xf]
    %v133 = vld [vmem:[#allocation5 + $0x160] sm:$0xf]
    %v134 = vld [vmem:[#allocation5 + $0x164] sm:$0xf]
    %v135 = vld [vmem:[#allocation5 + $0x168] sm:$0xf]
    %v136 = vld [vmem:[#allocation5 + $0x16c] sm:$0xf]
    %v137 = vld [vmem:[#allocation5 + $0x170] sm:$0xf]
    %v138 = vld [vmem:[#allocation5 + $0x174] sm:$0xf]
    %v139 = vld [vmem:[#allocation5 + $0x178] sm:$0xf]
    %v140 = vld [vmem:[#allocation5 + $0x17c] sm:$0xf]
    %v141 = vld [vmem:[#allocation5 + $0x180] sm:$0xf]
    %v142 = vld [vmem:[#allocation5 + $0x184] sm:$0xf]
    %v143 = vld [vmem:[#allocation5 + $0x188] sm:$0xf]
    %v144 = vld [vmem:[#allocation5 + $0x18c] sm:$0xf]
    %v145 = vld [vmem:[#allocation5 + $0x190] sm:$0xf]
    %v146 = vld [vmem:[#allocation5 + $0x194] sm:$0xf]
    %v147 = vld [vmem:[#allocation5 + $0x198] sm:$0xf]
    %v148 = vld [vmem:[#allocation5 + $0x19c] sm:$0xf]
    %v149 = vld [vmem:[#allocation5 + $0x1a0] sm:$0xf]
    %v150 = vld [vmem:[#allocation5 + $0x1a4] sm:$0xf]
    %v151 = vld [vmem:[#allocation5 + $0x1a8] sm:$0xf]
    %v152 = vld [vmem:[#allocation5 + $0x1ac] sm:$0xf]
    %v153 = vld [vmem:[#allocation5 + $0x1b0] sm:$0xf]
    %v154 = vld [vmem:[#allocation5 + $0x1b4] sm:$0xf]
    %v155 = vld [vmem:[#allocation5 + $0x1b8] sm:$0xf]
    %v156 = vld [vmem:[#allocation5 + $0x1bc] sm:$0xf]
    %v157 = vld [vmem:[#allocation5 + $0x1c0] sm:$0xf]
    %v158 = vld [vmem:[#allocation5 + $0x1c4] sm:$0xf]
    %v159 = vld [vmem:[#allocation5 + $0x1c8] sm:$0xf]
    %v160 = vld [vmem:[#allocation5 + $0x1cc] sm:$0xf]
    %v161 = vld [vmem:[#allocation5 + $0x1d0] sm:$0xf]
    %v162 = vld [vmem:[#allocation5 + $0x1d4] sm:$0xf]
    %v163 = vld [vmem:[#allocation5 + $0x1d8] sm:$0xf]
    %v164 = vld [vmem:[#allocation5 + $0x1dc] sm:$0xf]
    %v165 = vld [vmem:[#allocation5 + $0x1e0] sm:$0xf]
    %v166 = vld [vmem:[#allocation5 + $0x1e4] sm:$0xf]
    %v167 = vld [vmem:[#allocation5 + $0x1e8] sm:$0xf]
    %v168 = vld [vmem:[#allocation5 + $0x1ec] sm:$0xf]
    %v169 = vld [vmem:[#allocation5 + $0x1f0] sm:$0xf]
    %v170 = vld [vmem:[#allocation5 + $0x1f4] sm:$0xf]
    %v171 = vld [vmem:[#allocation5 + $0x1f8] sm:$0xf]
    %v172 = vld [vmem:[#allocation5 + $0x1fc] sm:$0xf]
    %v173 = vld [vmem:[#allocation5 + $0x200] sm:$0xf]
    %v174 = vld [vmem:[#allocation5 + $0x204] sm:$0xf]
    %v175 = vld [vmem:[#allocation5 + $0x208] sm:$0xf]
    %v176 = vld [vmem:[#allocation5 + $0x20c] sm:$0xf]
    %v177 = vld [vmem:[#allocation5 + $0x210] sm:$0xf]
    %v178 = vld [vmem:[#allocation5 + $0x214] sm:$0xf]
    %v179 = vld [vmem:[#allocation5 + $0x218] sm:$0xf]
    %v180 = vld [vmem:[#allocation5 + $0x21c] sm:$0xf]
    %v181 = vld [vmem:[#allocation5 + $0x220] sm:$0xf]
    %v182 = vld [vmem:[#allocation5 + $0x224] sm:$0xf]
    %v183 = vld [vmem:[#allocation5 + $0x228] sm:$0xf]
    %v184 = vld [vmem:[#allocation5 + $0x22c] sm:$0xf]
    %v185 = vld [vmem:[#allocation5 + $0x230] sm:$0xf]
    %v186 = vld [vmem:[#allocation5 + $0x234] sm:$0xf]
    %v187 = vld [vmem:[#allocation5 + $0x238] sm:$0xf]
    %v188 = vld [vmem:[#allocation5 + $0x23c] sm:$0xf]
    %v189 = vld [vmem:[#allocation5 + $0x240] sm:$0xf]
    %v190 = vld [vmem:[#allocation5 + $0x244] sm:$0xf]
    %v191 = vld [vmem:[#allocation5 + $0x248] sm:$0xf]
    %v192 = vld [vmem:[#allocation5 + $0x24c] sm:$0xf]
    %v193 = vld [vmem:[#allocation5 + $0x250] sm:$0xf]
    %v194 = vld [vmem:[#allocation5 + $0x254] sm:$0xf]
    %v195 = vld [vmem:[#allocation5 + $0x258] sm:$0xf]
    %v196 = vld [vmem:[#allocation5 + $0x25c] sm:$0xf]
    %v197 = vld [vmem:[#allocation5 + $0x260] sm:$0xf]
    %v198 = vld [vmem:[#allocation5 + $0x264] sm:$0xf]
    %v199 = vld [vmem:[#allocation5 + $0x268] sm:$0xf]
    %v200 = vld [vmem:[#allocation5 + $0x26c] sm:$0xf]
    %v201 = vld [vmem:[#allocation5 + $0x270] sm:$0xf]
    %v202 = vld [vmem:[#allocation5 + $0x274] sm:$0xf]
    %v203 = vld [vmem:[#allocation5 + $0x278] sm:$0xf]
    %v204 = vld [vmem:[#allocation5 + $0x27c] sm:$0xf]
    %v205 = vld [vmem:[#allocation5 + $0x280] sm:$0xf]
    %v206 = vld [vmem:[#allocation5 + $0x284] sm:$0xf]
    %v207 = vld [vmem:[#allocation5 + $0x288] sm:$0xf]
    %v208 = vld [vmem:[#allocation5 + $0x28c] sm:$0xf]
    %v209 = vld [vmem:[#allocation5 + $0x290] sm:$0xf]
    %v210 = vld [vmem:[#allocation5 + $0x294] sm:$0xf]
    %v211 = vld [vmem:[#allocation5 + $0x298] sm:$0xf]
    %v212 = vld [vmem:[#allocation5 + $0x29c] sm:$0xf]
    %v213 = vld [vmem:[#allocation5 + $0x2a0] sm:$0xf]
    %v214 = vld [vmem:[#allocation5 + $0x2a4] sm:$0xf]
    %v215 = vld [vmem:[#allocation5 + $0x2a8] sm:$0xf]
    %v216 = vld [vmem:[#allocation5 + $0x2ac] sm:$0xf]
    %v217 = vld [vmem:[#allocation5 + $0x2b0] sm:$0xf]
    %v218 = vld [vmem:[#allocation5 + $0x2b4] sm:$0xf]
    %v219 = vld [vmem:[#allocation5 + $0x2b8] sm:$0xf]
    %v220 = vld [vmem:[#allocation5 + $0x2bc] sm:$0xf]
    %v221 = vld [vmem:[#allocation5 + $0x2c0] sm:$0xf]
    %v222 = vld [vmem:[#allocation5 + $0x2c4] sm:$0xf]
    %v223 = vld [vmem:[#allocation5 + $0x2c8] sm:$0xf]
    %v224 = vld [vmem:[#allocation5 + $0x2cc] sm:$0xf]
    %v225 = vld [vmem:[#allocation5 + $0x2d0] sm:$0xf]
    %v226 = vld [vmem:[#allocation5 + $0x2d4] sm:$0xf]
    %v227 = vld [vmem:[#allocation5 + $0x2d8] sm:$0xf]
    %v228 = vld [vmem:[#allocation5 + $0x2dc] sm:$0xf]
    %v229 = vld [vmem:[#allocation5 + $0x2e0] sm:$0xf]
    %v230 = vld [vmem:[#allocation5 + $0x2e4] sm:$0xf]
    %v231 = vld [vmem:[#allocation5 + $0x2e8] sm:$0xf]
    %v232 = vld [vmem:[#allocation5 + $0x2ec] sm:$0xf]
    %v233 = vld [vmem:[#allocation5 + $0x2f0] sm:$0xf]
    %v234 = vld [vmem:[#allocation5 + $0x2f4] sm:$0xf]
    %v235 = vld [vmem:[#allocation5 + $0x2f8] sm:$0xf]
    %v236 = vld [vmem:[#allocation5 + $0x2fc] sm:$0xf]
    %v237 = vld [vmem:[#allocation5 + $0x300] sm:$0xf]
    %v238 = vld [vmem:[#allocation5 + $0x304] sm:$0xf]
    %v239 = vld [vmem:[#allocation5 + $0x308] sm:$0xf]
    %v240 = vld [vmem:[#allocation5 + $0x30c] sm:$0xf]
    %v241 = vld [vmem:[#allocation5 + $0x310] sm:$0xf]
    %v242 = vld [vmem:[#allocation5 + $0x314] sm:$0xf]
    %v243 = vld [vmem:[#allocation5 + $0x318] sm:$0xf]
    %v244 = vld [vmem:[#allocation5 + $0x31c] sm:$0xf]
    %v245 = vld [vmem:[#allocation5 + $0x320] sm:$0xf]
    %v246 = vld [vmem:[#allocation5 + $0x324] sm:$0xf]
    %v247 = vld [vmem:[#allocation5 + $0x328] sm:$0xf]
    %v248 = vld [vmem:[#allocation5 + $0x32c] sm:$0xf]
    %v249 = vld [vmem:[#allocation5 + $0x330] sm:$0xf]
    %v250 = vld [vmem:[#allocation5 + $0x334] sm:$0xf]
    %v251 = vld [vmem:[#allocation5 + $0x338] sm:$0xf]
    %v252 = vld [vmem:[#allocation5 + $0x33c] sm:$0xf]
    %v253 = vld [vmem:[#allocation5 + $0x340] sm:$0xf]
    %v254 = vld [vmem:[#allocation5 + $0x344] sm:$0xf]
    %v255 = vld [vmem:[#allocation5 + $0x348] sm:$0xf]
    %v256 = vld [vmem:[#allocation5 + $0x34c] sm:$0xf]
    %v257 = vld [vmem:[#allocation5 + $0x350] sm:$0xf]
    %v258 = vld [vmem:[#allocation5 + $0x354] sm:$0xf]
    %v259 = vld [vmem:[#allocation5 + $0x358] sm:$0xf]
    %v260 = vld [vmem:[#allocation5 + $0x35c] sm:$0xf]
    %v261 = vld [vmem:[#allocation5 + $0x360] sm:$0xf]
    %v262 = vld [vmem:[#allocation5 + $0x364] sm:$0xf]
    %v263 = vld [vmem:[#allocation5 + $0x368] sm:$0xf]
    %v264 = vld [vmem:[#allocation5 + $0x36c] sm:$0xf]
    %v265 = vld [vmem:[#allocation5 + $0x370] sm:$0xf]
    %v266 = vld [vmem:[#allocation5 + $0x374] sm:$0xf]
    %v267 = vld [vmem:[#allocation5 + $0x378] sm:$0xf]
    %v268 = vld [vmem:[#allocation5 + $0x37c] sm:$0xf]
    %v269 = vld [vmem:[#allocation5 + $0x380] sm:$0xf]
    %v270 = vld [vmem:[#allocation5 + $0x384] sm:$0xf]
    %v271 = vld [vmem:[#allocation5 + $0x388] sm:$0xf]
    %v272 = vld [vmem:[#allocation5 + $0x38c] sm:$0xf]
    %v273 = vld [vmem:[#allocation5 + $0x390] sm:$0xf]
    %v274 = vld [vmem:[#allocation5 + $0x394] sm:$0xf]
    %v275 = vld [vmem:[#allocation5 + $0x398] sm:$0xf]
    %v276 = vld [vmem:[#allocation5 + $0x39c] sm:$0xf]
    %v277 = vld [vmem:[#allocation5 + $0x3a0] sm:$0xf]
    %v278 = vld [vmem:[#allocation5 + $0x3a4] sm:$0xf]
    %v279 = vld [vmem:[#allocation5 + $0x3a8] sm:$0xf]
    %v280 = vld [vmem:[#allocation5 + $0x3ac] sm:$0xf]
    %v281 = vld [vmem:[#allocation5 + $0x3b0] sm:$0xf]
    %v282 = vld [vmem:[#allocation5 + $0x3b4] sm:$0xf]
    %v283 = vld [vmem:[#allocation5 + $0x3b8] sm:$0xf]
    %v284 = vld [vmem:[#allocation5 + $0x3bc] sm:$0xf]
    %v285 = vld [vmem:[#allocation5 + $0x3c0] sm:$0xf]
    %v286 = vld [vmem:[#allocation5 + $0x3c4] sm:$0xf]
    %v287 = vld [vmem:[#allocation5 + $0x3c8] sm:$0xf]
    %v288 = vld [vmem:[#allocation5 + $0x3cc] sm:$0xf]
    %v289 = vld [vmem:[#allocation5 + $0x3d0] sm:$0xf]
    %v290 = vld [vmem:[#allocation5 + $0x3d4] sm:$0xf]
    %v291 = vld [vmem:[#allocation5 + $0x3d8] sm:$0xf]
    %v292 = vld [vmem:[#allocation5 + $0x3dc] sm:$0xf]
    %v293 = vld [vmem:[#allocation5 + $0x3e0] sm:$0xf]
    %v294 = vld [vmem:[#allocation5 + $0x3e4] sm:$0xf]
    %v295 = vld [vmem:[#allocation5 + $0x3e8] sm:$0xf]
    %v296 = vld [vmem:[#allocation5 + $0x3ec] sm:$0xf]
    %v297 = vld [vmem:[#allocation5 + $0x3f0] sm:$0xf]
    %v298 = vld [vmem:[#allocation5 + $0x3f4] sm:$0xf]
    %v299 = vld [vmem:[#allocation5 + $0x3f8] sm:$0xf]
    %v300 = vld [vmem:[#allocation5 + $0x3fc] sm:$0xf]
    %v301 = vld [vmem:[#allocation5 + $0x400] sm:$0xf]
    %v302 = vld [vmem:[#allocation5 + $0x404] sm:$0xf]
    %v303 = vld [vmem:[#allocation5 + $0x408] sm:$0xf]
    %v304 = vld [vmem:[#allocation5 + $0x40c] sm:$0xf]
    %v305 = vld [vmem:[#allocation5 + $0x410] sm:$0xf]
    %v306 = vld [vmem:[#allocation5 + $0x414] sm:$0xf]
    %v307 = vld [vmem:[#allocation5 + $0x418] sm:$0xf]
    %v308 = vld [vmem:[#allocation5 + $0x41c] sm:$0xf]
    %v309 = vld [vmem:[#allocation5 + $0x420] sm:$0xf]
    %v310 = vld [vmem:[#allocation5 + $0x424] sm:$0xf]
    %v311 = vld [vmem:[#allocation5 + $0x428] sm:$0xf]
    %v312 = vld [vmem:[#allocation5 + $0x42c] sm:$0xf]
    %v313 = vld [vmem:[#allocation5 + $0x430] sm:$0xf]
    %v314 = vld [vmem:[#allocation5 + $0x434] sm:$0xf]
    %v315 = vld [vmem:[#allocation5 + $0x438] sm:$0xf]
    %v316 = vld [vmem:[#allocation5 + $0x43c] sm:$0xf]
    %v317 = vld [vmem:[#allocation5 + $0x440] sm:$0xf]
    %v318 = vld [vmem:[#allocation5 + $0x444] sm:$0xf]
    %v319 = vld [vmem:[#allocation5 + $0x448] sm:$0xf]
    %v320 = vld [vmem:[#allocation5 + $0x44c] sm:$0xf]
    %v321 = vld [vmem:[#allocation5 + $0x450] sm:$0xf]
    %v322 = vld [vmem:[#allocation5 + $0x454] sm:$0xf]
    %v323 = vld [vmem:[#allocation5 + $0x458] sm:$0xf]
    %v324 = vld [vmem:[#allocation5 + $0x45c] sm:$0xf]
    %v325 = vld [vmem:[#allocation5 + $0x460] sm:$0xf]
    %v326 = vld [vmem:[#allocation5 + $0x464] sm:$0xf]
    %v327 = vld [vmem:[#allocation5 + $0x468] sm:$0xf]
    %v328 = vld [vmem:[#allocation5 + $0x46c] sm:$0xf]
    %v329 = vld [vmem:[#allocation5 + $0x470] sm:$0xf]
    %v330 = vld [vmem:[#allocation5 + $0x474] sm:$0xf]
    %v331 = vld [vmem:[#allocation5 + $0x478] sm:$0xf]
    %v332 = vld [vmem:[#allocation5 + $0x47c] sm:$0xf]
    %v333 = vld [vmem:[#allocation5 + $0x480] sm:$0xf]
    %v334 = vld [vmem:[#allocation5 + $0x484] sm:$0xf]
    %v335 = vld [vmem:[#allocation5 + $0x488] sm:$0xf]
    %v336 = vld [vmem:[#allocation5 + $0x48c] sm:$0xf]
    %v337 = vld [vmem:[#allocation5 + $0x490] sm:$0xf]
    %v338 = vld [vmem:[#allocation5 + $0x494] sm:$0xf]
    %v339 = vld [vmem:[#allocation5 + $0x498] sm:$0xf]
    %v340 = vld [vmem:[#allocation5 + $0x49c] sm:$0xf]
    %v341 = vld [vmem:[#allocation5 + $0x4a0] sm:$0xf]
    %v342 = vld [vmem:[#allocation5 + $0x4a4] sm:$0xf]
    %v343 = vld [vmem:[#allocation5 + $0x4a8] sm:$0xf]
    %v344 = vld [vmem:[#allocation5 + $0x4ac] sm:$0xf]
    %v345 = vld [vmem:[#allocation5 + $0x4b0] sm:$0xf]
    %v346 = vld [vmem:[#allocation5 + $0x4b4] sm:$0xf]
    %v347 = vld [vmem:[#allocation5 + $0x4b8] sm:$0xf]
    %v348 = vld [vmem:[#allocation5 + $0x4bc] sm:$0xf]
    %v349 = vld [vmem:[#allocation5 + $0x4c0] sm:$0xf]
    %v350 = vld [vmem:[#allocation5 + $0x4c4] sm:$0xf]
    %v351 = vld [vmem:[#allocation5 + $0x4c8] sm:$0xf]
    %v352 = vld [vmem:[#allocation5 + $0x4cc] sm:$0xf]
    %v353 = vld [vmem:[#allocation5 + $0x4d0] sm:$0xf]
    %v354 = vld [vmem:[#allocation5 + $0x4d4] sm:$0xf]
    %v355 = vld [vmem:[#allocation5 + $0x4d8] sm:$0xf]
    %v356 = vld [vmem:[#allocation5 + $0x4dc] sm:$0xf]
    %v357 = vld [vmem:[#allocation5 + $0x4e0] sm:$0xf]
    %v358 = vld [vmem:[#allocation5 + $0x4e4] sm:$0xf]
    %v359 = vld [vmem:[#allocation5 + $0x4e8] sm:$0xf]
    %v360 = vld [vmem:[#allocation5 + $0x4ec] sm:$0xf]
    %v361 = vld [vmem:[#allocation5 + $0x4f0] sm:$0xf]
    %v362 = vld [vmem:[#allocation5 + $0x4f4] sm:$0xf]
    %v363 = vld [vmem:[#allocation5 + $0x4f8] sm:$0xf]
    %v364 = vld [vmem:[#allocation5 + $0x4fc] sm:$0xf]
    %v365 = vld [vmem:[#allocation5 + $0x500] sm:$0xf]
    %v366 = vld [vmem:[#allocation5 + $0x504] sm:$0xf]
    %v367 = vld [vmem:[#allocation5 + $0x508] sm:$0xf]
    %v368 = vld [vmem:[#allocation5 + $0x50c] sm:$0xf]
    %v369 = vld [vmem:[#allocation5 + $0x510] sm:$0xf]
    %v370 = vld [vmem:[#allocation5 + $0x514] sm:$0xf]
    %v371 = vld [vmem:[#allocation5 + $0x518] sm:$0xf]
    %v372 = vld [vmem:[#allocation5 + $0x51c] sm:$0xf]
    %v373 = vld [vmem:[#allocation5 + $0x520] sm:$0xf]
    %v374 = vld [vmem:[#allocation5 + $0x524] sm:$0xf]
    %v375 = vld [vmem:[#allocation5 + $0x528] sm:$0xf]
    %v376 = vld [vmem:[#allocation5 + $0x52c] sm:$0xf]
    %v377 = vld [vmem:[#allocation5 + $0x530] sm:$0xf]
    %v378 = vld [vmem:[#allocation5 + $0x534] sm:$0xf]
    %v379 = vld [vmem:[#allocation5 + $0x538] sm:$0xf]
    %v380 = vld [vmem:[#allocation5 + $0x53c] sm:$0xf]
    %v381 = vld [vmem:[#allocation5 + $0x540] sm:$0xf]
    %v382 = vld [vmem:[#allocation5 + $0x544] sm:$0xf]
    %v383 = vld [vmem:[#allocation5 + $0x548] sm:$0xf]
    %v384 = vld [vmem:[#allocation5 + $0x54c] sm:$0xf]
    %v385 = vld [vmem:[#allocation5 + $0x550] sm:$0xf]
    %v386 = vld [vmem:[#allocation5 + $0x554] sm:$0xf]
    %v387 = vld [vmem:[#allocation5 + $0x558] sm:$0xf]
    %v388 = vld [vmem:[#allocation5 + $0x55c] sm:$0xf]
    %v389 = vld [vmem:[#allocation5 + $0x560] sm:$0xf]
    %v390 = vld [vmem:[#allocation5 + $0x564] sm:$0xf]
    %v391 = vld [vmem:[#allocation5 + $0x568] sm:$0xf]
    %v392 = vld [vmem:[#allocation5 + $0x56c] sm:$0xf]
    %v393 = vld [vmem:[#allocation5 + $0x570] sm:$0xf]
    %v394 = vld [vmem:[#allocation5 + $0x574] sm:$0xf]
    %v395 = vld [vmem:[#allocation5 + $0x578] sm:$0xf]
    %v396 = vld [vmem:[#allocation5 + $0x57c] sm:$0xf]
    %v397 = vld [vmem:[#allocation5 + $0x580] sm:$0xf]
    %v398 = vld [vmem:[#allocation5 + $0x584] sm:$0xf]
    %v399 = vld [vmem:[#allocation5 + $0x588] sm:$0xf]
    %v400 = vld [vmem:[#allocation5 + $0x58c] sm:$0xf]
    %v401 = vld [vmem:[#allocation5 + $0x590] sm:$0xf]
    %v402 = vld [vmem:[#allocation5 + $0x594] sm:$0xf]
    %v403 = vld [vmem:[#allocation5 + $0x598] sm:$0xf]
    %v404 = vld [vmem:[#allocation5 + $0x59c] sm:$0xf]
    %v405 = vld [vmem:[#allocation5 + $0x5a0] sm:$0xf]
    %v406 = vld [vmem:[#allocation5 + $0x5a4] sm:$0xf]
    %v407 = vld [vmem:[#allocation5 + $0x5a8] sm:$0xf]
    %v408 = vld [vmem:[#allocation5 + $0x5ac] sm:$0xf]
    %v409 = vld [vmem:[#allocation5 + $0x5b0] sm:$0xf]
    %v410 = vld [vmem:[#allocation5 + $0x5b4] sm:$0xf]
    %v411 = vld [vmem:[#allocation5 + $0x5b8] sm:$0xf]
    %v412 = vld [vmem:[#allocation5 + $0x5bc] sm:$0xf]
    %v413 = vld [vmem:[#allocation5 + $0x5c0] sm:$0xf]
    %v414 = vld [vmem:[#allocation5 + $0x5c4] sm:$0xf]
    %v415 = vld [vmem:[#allocation5 + $0x5c8] sm:$0xf]
    %v416 = vld [vmem:[#allocation5 + $0x5cc] sm:$0xf]
    %v417 = vld [vmem:[#allocation5 + $0x5d0] sm:$0xf]
    %v418 = vld [vmem:[#allocation5 + $0x5d4] sm:$0xf]
    %v419 = vld [vmem:[#allocation5 + $0x5d8] sm:$0xf]
    %v420 = vld [vmem:[#allocation5 + $0x5dc] sm:$0xf]
    %v421 = vld [vmem:[#allocation5 + $0x5e0] sm:$0xf]
    %v422 = vld [vmem:[#allocation5 + $0x5e4] sm:$0xf]
    %v423 = vld [vmem:[#allocation5 + $0x5e8] sm:$0xf]
    %v424 = vld [vmem:[#allocation5 + $0x5ec] sm:$0xf]
    %v425 = vld [vmem:[#allocation5 + $0x5f0] sm:$0xf]
    %v426 = vld [vmem:[#allocation5 + $0x5f4] sm:$0xf]
    %v427 = vld [vmem:[#allocation5 + $0x5f8] sm:$0xf]
    %v428 = vld [vmem:[#allocation5 + $0x5fc] sm:$0xf]
    %v435 = vcombine.high %v39, %v39
    %v437 = vunpack.c.l.s4 1983009808
    %v438 = vunpack.c.0.s8 %v437
    %v439 = vlaneseq
    %v440 = vshrl.u32 %v439, 7
    %v441 = vsub.s32 %v438, %v440
    %v442 = vrot.slane %v39, %v441
    %v444 = vunpack.c.l.s4 1983009808
    %v445 = vunpack.c.0.s8 %v444
    %v446 = vlaneseq
    %v447 = vshrl.u32 %v446, 7
    %v448 = vsub.s32 %v445, %v447
    %v449 = vrot.slane %v435, %v448
    %v450 = vcombine.high %v442, %v442
    %v451 = vcombine.high %v449, %v449
    %v452 = vcombine.high %v40, %v40
    %v454 = vunpack.c.l.s4 1983009808
    %v455 = vunpack.c.0.s8 %v454
    %v456 = vlaneseq
    %v457 = vshrl.u32 %v456, 7
    %v458 = vsub.s32 %v455, %v457
    %v459 = vrot.slane %v40, %v458
    %v461 = vunpack.c.l.s4 1983009808
    %v462 = vunpack.c.0.s8 %v461
    %v463 = vlaneseq
    %v464 = vshrl.u32 %v463, 7
    %v465 = vsub.s32 %v462, %v464
    %v466 = vrot.slane %v452, %v465
    %v467 = vcombine.high %v459, %v459
    %v468 = vcombine.high %v466, %v466
    %v469 = vcombine.high %v41, %v41
    %v471 = vunpack.c.l.s4 1983009808
    %v472 = vunpack.c.0.s8 %v471
    %v473 = vlaneseq
    %v474 = vshrl.u32 %v473, 7
    %v475 = vsub.s32 %v472, %v474
    %v476 = vrot.slane %v41, %v475
    %v478 = vunpack.c.l.s4 1983009808
    %v479 = vunpack.c.0.s8 %v478
    %v480 = vlaneseq
    %v481 = vshrl.u32 %v480, 7
    %v482 = vsub.s32 %v479, %v481
    %v483 = vrot.slane %v469, %v482
    %v484 = vcombine.high %v476, %v476
    %v485 = vcombine.high %v483, %v483
    %v486 = vcombine.high %v42, %v42
    %v488 = vunpack.c.l.s4 1983009808
    %v489 = vunpack.c.0.s8 %v488
    %v490 = vlaneseq
    %v491 = vshrl.u32 %v490, 7
    %v492 = vsub.s32 %v489, %v491
    %v493 = vrot.slane %v42, %v492
    %v495 = vunpack.c.l.s4 1983009808
    %v496 = vunpack.c.0.s8 %v495
    %v497 = vlaneseq
    %v498 = vshrl.u32 %v497, 7
    %v499 = vsub.s32 %v496, %v498
    %v500 = vrot.slane %v486, %v499
    %v501 = vcombine.high %v493, %v493
    %v502 = vcombine.high %v500, %v500
    %v503 = vcombine.high %v43, %v43
    %v505 = vunpack.c.l.s4 1983009808
    %v506 = vunpack.c.0.s8 %v505
    %v507 = vlaneseq
    %v508 = vshrl.u32 %v507, 7
    %v509 = vsub.s32 %v506, %v508
    %v510 = vrot.slane %v43, %v509
    %v512 = vunpack.c.l.s4 1983009808
    %v513 = vunpack.c.0.s8 %v512
    %v514 = vlaneseq
    %v515 = vshrl.u32 %v514, 7
    %v516 = vsub.s32 %v513, %v515
    %v517 = vrot.slane %v503, %v516
    %v518 = vcombine.high %v510, %v510
    %v519 = vcombine.high %v517, %v517
    %v520 = vcombine.high %v44, %v44
    %v522 = vunpack.c.l.s4 1983009808
    %v523 = vunpack.c.0.s8 %v522
    %v524 = vlaneseq
    %v525 = vshrl.u32 %v524, 7
    %v526 = vsub.s32 %v523, %v525
    %v527 = vrot.slane %v44, %v526
    %v529 = vunpack.c.l.s4 1983009808
    %v530 = vunpack.c.0.s8 %v529
    %v531 = vlaneseq
    %v532 = vshrl.u32 %v531, 7
    %v533 = vsub.s32 %v530, %v532
    %v534 = vrot.slane %v520, %v533
    %v535 = vcombine.high %v527, %v527
    %v536 = vcombine.high %v534, %v534
    %v945 = vunpack.c.l.b16 %v45
    %v946 = vunpack.c.l.b16 %v46
    %v947 = vunpack.c.l.b16 %v47
    %v948 = vunpack.c.l.b16 %v48
    %v949 = vunpack.c.l.b16 %v49
    %v950 = vunpack.c.l.b16 %v50
    %v951 = vunpack.c.l.b16 %v51
    %v952 = vunpack.c.l.b16 %v52
    %v953 = vunpack.c.l.b16 %v53
    %v954 = vunpack.c.l.b16 %v54
    %v955 = vunpack.c.l.b16 %v55
    %v956 = vunpack.c.l.b16 %v56
    %v957 = vunpack.c.l.b16 %v57
    %v958 = vunpack.c.l.b16 %v58
    %v959 = vunpack.c.l.b16 %v59
    %v960 = vunpack.c.l.b16 %v60
    %v961 = vunpack.c.l.b16 %v61
    %v962 = vunpack.c.l.b16 %v62
    %v963 = vunpack.c.l.b16 %v63
    %v964 = vunpack.c.l.b16 %v64
    %v965 = vunpack.c.l.b16 %v65
    %v966 = vunpack.c.l.b16 %v66
    %v967 = vunpack.c.l.b16 %v67
    %v968 = vunpack.c.l.b16 %v68
    %v969 = vunpack.c.l.b16 %v69
    %v970 = vunpack.c.l.b16 %v70
    %v971 = vunpack.c.l.b16 %v71
    %v972 = vunpack.c.l.b16 %v72
    %v973 = vunpack.c.l.b16 %v73
    %v974 = vunpack.c.l.b16 %v74
    %v975 = vunpack.c.l.b16 %v75
    %v976 = vunpack.c.l.b16 %v76
    %v977 = vunpack.c.l.b16 %v77
    %v978 = vunpack.c.l.b16 %v78
    %v979 = vunpack.c.l.b16 %v79
    %v980 = vunpack.c.l.b16 %v80
    %v981 = vunpack.c.l.b16 %v81
    %v982 = vunpack.c.l.b16 %v82
    %v983 = vunpack.c.l.b16 %v83
    %v984 = vunpack.c.l.b16 %v84
    %v985 = vunpack.c.l.b16 %v85
    %v986 = vunpack.c.l.b16 %v86
    %v987 = vunpack.c.l.b16 %v87
    %v988 = vunpack.c.l.b16 %v88
    %v989 = vunpack.c.l.b16 %v89
    %v990 = vunpack.c.l.b16 %v90
    %v991 = vunpack.c.l.b16 %v91
    %v992 = vunpack.c.l.b16 %v92
    %v993 = vunpack.c.l.b16 %v93
    %v994 = vunpack.c.l.b16 %v94
    %v995 = vunpack.c.l.b16 %v95
    %v996 = vunpack.c.l.b16 %v96
    %v997 = vunpack.c.l.b16 %v97
    %v998 = vunpack.c.l.b16 %v98
    %v999 = vunpack.c.l.b16 %v99
    %v1000 = vunpack.c.l.b16 %v100
    %v1001 = vunpack.c.l.b16 %v101
    %v1002 = vunpack.c.l.b16 %v102
    %v1003 = vunpack.c.l.b16 %v103
    %v1004 = vunpack.c.l.b16 %v104
    %v1005 = vunpack.c.l.b16 %v105
    %v1006 = vunpack.c.l.b16 %v106
    %v1007 = vunpack.c.l.b16 %v107
    %v1008 = vunpack.c.l.b16 %v108
    %v1009 = vunpack.c.l.b16 %v109
    %v1010 = vunpack.c.l.b16 %v110
    %v1011 = vunpack.c.l.b16 %v111
    %v1012 = vunpack.c.l.b16 %v112
    %v1013 = vunpack.c.l.b16 %v113
    %v1014 = vunpack.c.l.b16 %v114
    %v1015 = vunpack.c.l.b16 %v115
    %v1016 = vunpack.c.l.b16 %v116
    %v1017 = vunpack.c.l.b16 %v117
    %v1018 = vunpack.c.l.b16 %v118
    %v1019 = vunpack.c.l.b16 %v119
    %v1020 = vunpack.c.l.b16 %v120
    %v1021 = vunpack.c.l.b16 %v121
    %v1022 = vunpack.c.l.b16 %v122
    %v1023 = vunpack.c.l.b16 %v123
    %v1024 = vunpack.c.l.b16 %v124
    %v1025 = vunpack.c.l.b16 %v125
    %v1026 = vunpack.c.l.b16 %v126
    %v1027 = vunpack.c.l.b16 %v127
    %v1028 = vunpack.c.l.b16 %v128
    %v1029 = vunpack.c.l.b16 %v129
    %v1030 = vunpack.c.l.b16 %v130
    %v1031 = vunpack.c.l.b16 %v131
    %v1032 = vunpack.c.l.b16 %v132
    %v1033 = vunpack.c.l.b16 %v133
    %v1034 = vunpack.c.l.b16 %v134
    %v1035 = vunpack.c.l.b16 %v135
    %v1036 = vunpack.c.l.b16 %v136
    %v1037 = vunpack.c.l.b16 %v137
    %v1038 = vunpack.c.l.b16 %v138
    %v1039 = vunpack.c.l.b16 %v139
    %v1040 = vunpack.c.l.b16 %v140
    %v1041 = vunpack.c.l.b16 %v141
    %v1042 = vunpack.c.l.b16 %v142
    %v1043 = vunpack.c.l.b16 %v143
    %v1044 = vunpack.c.l.b16 %v144
    %v1045 = vunpack.c.l.b16 %v145
    %v1046 = vunpack.c.l.b16 %v146
    %v1047 = vunpack.c.l.b16 %v147
    %v1048 = vunpack.c.l.b16 %v148
    %v1049 = vunpack.c.l.b16 %v149
    %v1050 = vunpack.c.l.b16 %v150
    %v1051 = vunpack.c.l.b16 %v151
    %v1052 = vunpack.c.l.b16 %v152
    %v1053 = vunpack.c.l.b16 %v153
    %v1054 = vunpack.c.l.b16 %v154
    %v1055 = vunpack.c.l.b16 %v155
    %v1056 = vunpack.c.l.b16 %v156
    %v1057 = vunpack.c.l.b16 %v157
    %v1058 = vunpack.c.l.b16 %v158
    %v1059 = vunpack.c.l.b16 %v159
    %v1060 = vunpack.c.l.b16 %v160
    %v1061 = vunpack.c.l.b16 %v161
    %v1062 = vunpack.c.l.b16 %v162
    %v1063 = vunpack.c.l.b16 %v163
    %v1064 = vunpack.c.l.b16 %v164
    %v1065 = vunpack.c.l.b16 %v165
    %v1066 = vunpack.c.l.b16 %v166
    %v1067 = vunpack.c.l.b16 %v167
    %v1068 = vunpack.c.l.b16 %v168
    %v1069 = vunpack.c.l.b16 %v169
    %v1070 = vunpack.c.l.b16 %v170
    %v1071 = vunpack.c.l.b16 %v171
    %v1072 = vunpack.c.l.b16 %v172
    %v1073 = vunpack.c.l.b16 %v173
    %v1074 = vunpack.c.l.b16 %v174
    %v1075 = vunpack.c.l.b16 %v175
    %v1076 = vunpack.c.l.b16 %v176
    %v1077 = vunpack.c.l.b16 %v177
    %v1078 = vunpack.c.l.b16 %v178
    %v1079 = vunpack.c.l.b16 %v179
    %v1080 = vunpack.c.l.b16 %v180
    %v1081 = vunpack.c.l.b16 %v181
    %v1082 = vunpack.c.l.b16 %v182
    %v1083 = vunpack.c.l.b16 %v183
    %v1084 = vunpack.c.l.b16 %v184
    %v1085 = vunpack.c.l.b16 %v185
    %v1086 = vunpack.c.l.b16 %v186
    %v1087 = vunpack.c.l.b16 %v187
    %v1088 = vunpack.c.l.b16 %v188
    %v1089 = vunpack.c.l.b16 %v189
    %v1090 = vunpack.c.l.b16 %v190
    %v1091 = vunpack.c.l.b16 %v191
    %v1092 = vunpack.c.l.b16 %v192
    %v1093 = vunpack.c.l.b16 %v193
    %v1094 = vunpack.c.l.b16 %v194
    %v1095 = vunpack.c.l.b16 %v195
    %v1096 = vunpack.c.l.b16 %v196
    %v1097 = vunpack.c.l.b16 %v197
    %v1098 = vunpack.c.l.b16 %v198
    %v1099 = vunpack.c.l.b16 %v199
    %v1100 = vunpack.c.l.b16 %v200
    %v1101 = vunpack.c.l.b16 %v201
    %v1102 = vunpack.c.l.b16 %v202
    %v1103 = vunpack.c.l.b16 %v203
    %v1104 = vunpack.c.l.b16 %v204
    %v1105 = vunpack.c.l.b16 %v205
    %v1106 = vunpack.c.l.b16 %v206
    %v1107 = vunpack.c.l.b16 %v207
    %v1108 = vunpack.c.l.b16 %v208
    %v1109 = vunpack.c.l.b16 %v209
    %v1110 = vunpack.c.l.b16 %v210
    %v1111 = vunpack.c.l.b16 %v211
    %v1112 = vunpack.c.l.b16 %v212
    %v1113 = vunpack.c.l.b16 %v213
    %v1114 = vunpack.c.l.b16 %v214
    %v1115 = vunpack.c.l.b16 %v215
    %v1116 = vunpack.c.l.b16 %v216
    %v1117 = vunpack.c.l.b16 %v217
    %v1118 = vunpack.c.l.b16 %v218
    %v1119 = vunpack.c.l.b16 %v219
    %v1120 = vunpack.c.l.b16 %v220
    %v1121 = vunpack.c.l.b16 %v221
    %v1122 = vunpack.c.l.b16 %v222
    %v1123 = vunpack.c.l.b16 %v223
    %v1124 = vunpack.c.l.b16 %v224
    %v1125 = vunpack.c.l.b16 %v225
    %v1126 = vunpack.c.l.b16 %v226
    %v1127 = vunpack.c.l.b16 %v227
    %v1128 = vunpack.c.l.b16 %v228
    %v1129 = vunpack.c.l.b16 %v229
    %v1130 = vunpack.c.l.b16 %v230
    %v1131 = vunpack.c.l.b16 %v231
    %v1132 = vunpack.c.l.b16 %v232
    %v1133 = vunpack.c.l.b16 %v233
    %v1134 = vunpack.c.l.b16 %v234
    %v1135 = vunpack.c.l.b16 %v235
    %v1136 = vunpack.c.l.b16 %v236
    %v1137 = vunpack.c.l.b16 %v237
    %v1138 = vunpack.c.l.b16 %v238
    %v1139 = vunpack.c.l.b16 %v239
    %v1140 = vunpack.c.l.b16 %v240
    %v1141 = vunpack.c.l.b16 %v241
    %v1142 = vunpack.c.l.b16 %v242
    %v1143 = vunpack.c.l.b16 %v243
    %v1144 = vunpack.c.l.b16 %v244
    %v1145 = vunpack.c.l.b16 %v245
    %v1146 = vunpack.c.l.b16 %v246
    %v1147 = vunpack.c.l.b16 %v247
    %v1148 = vunpack.c.l.b16 %v248
    %v1149 = vunpack.c.l.b16 %v249
    %v1150 = vunpack.c.l.b16 %v250
    %v1151 = vunpack.c.l.b16 %v251
    %v1152 = vunpack.c.l.b16 %v252
    %v1153 = vunpack.c.l.b16 %v253
    %v1154 = vunpack.c.l.b16 %v254
    %v1155 = vunpack.c.l.b16 %v255
    %v1156 = vunpack.c.l.b16 %v256
    %v1157 = vunpack.c.l.b16 %v257
    %v1158 = vunpack.c.l.b16 %v258
    %v1159 = vunpack.c.l.b16 %v259
    %v1160 = vunpack.c.l.b16 %v260
    %v1161 = vunpack.c.l.b16 %v261
    %v1162 = vunpack.c.l.b16 %v262
    %v1163 = vunpack.c.l.b16 %v263
    %v1164 = vunpack.c.l.b16 %v264
    %v1165 = vunpack.c.l.b16 %v265
    %v1166 = vunpack.c.l.b16 %v266
    %v1167 = vunpack.c.l.b16 %v267
    %v1168 = vunpack.c.l.b16 %v268
    %v1169 = vunpack.c.l.b16 %v269
    %v1170 = vunpack.c.l.b16 %v270
    %v1171 = vunpack.c.l.b16 %v271
    %v1172 = vunpack.c.l.b16 %v272
    %v1173 = vunpack.c.l.b16 %v273
    %v1174 = vunpack.c.l.b16 %v274
    %v1175 = vunpack.c.l.b16 %v275
    %v1176 = vunpack.c.l.b16 %v276
    %v1177 = vunpack.c.l.b16 %v277
    %v1178 = vunpack.c.l.b16 %v278
    %v1179 = vunpack.c.l.b16 %v279
    %v1180 = vunpack.c.l.b16 %v280
    %v1181 = vunpack.c.l.b16 %v281
    %v1182 = vunpack.c.l.b16 %v282
    %v1183 = vunpack.c.l.b16 %v283
    %v1184 = vunpack.c.l.b16 %v284
    %v1185 = vunpack.c.l.b16 %v285
    %v1186 = vunpack.c.l.b16 %v286
    %v1187 = vunpack.c.l.b16 %v287
    %v1188 = vunpack.c.l.b16 %v288
    %v1189 = vunpack.c.l.b16 %v289
    %v1190 = vunpack.c.l.b16 %v290
    %v1191 = vunpack.c.l.b16 %v291
    %v1192 = vunpack.c.l.b16 %v292
    %v1193 = vunpack.c.l.b16 %v293
    %v1194 = vunpack.c.l.b16 %v294
    %v1195 = vunpack.c.l.b16 %v295
    %v1196 = vunpack.c.l.b16 %v296
    %v1197 = vunpack.c.l.b16 %v297
    %v1198 = vunpack.c.l.b16 %v298
    %v1199 = vunpack.c.l.b16 %v299
    %v1200 = vunpack.c.l.b16 %v300
    %v1201 = vunpack.c.l.b16 %v301
    %v1202 = vunpack.c.l.b16 %v302
    %v1203 = vunpack.c.l.b16 %v303
    %v1204 = vunpack.c.l.b16 %v304
    %v1205 = vunpack.c.l.b16 %v305
    %v1206 = vunpack.c.l.b16 %v306
    %v1207 = vunpack.c.l.b16 %v307
    %v1208 = vunpack.c.l.b16 %v308
    %v1209 = vunpack.c.l.b16 %v309
    %v1210 = vunpack.c.l.b16 %v310
    %v1211 = vunpack.c.l.b16 %v311
    %v1212 = vunpack.c.l.b16 %v312
    %v1213 = vunpack.c.l.b16 %v313
    %v1214 = vunpack.c.l.b16 %v314
    %v1215 = vunpack.c.l.b16 %v315
    %v1216 = vunpack.c.l.b16 %v316
    %v1217 = vunpack.c.l.b16 %v317
    %v1218 = vunpack.c.l.b16 %v318
    %v1219 = vunpack.c.l.b16 %v319
    %v1220 = vunpack.c.l.b16 %v320
    %v1221 = vunpack.c.l.b16 %v321
    %v1222 = vunpack.c.l.b16 %v322
    %v1223 = vunpack.c.l.b16 %v323
    %v1224 = vunpack.c.l.b16 %v324
    %v1225 = vunpack.c.l.b16 %v325
    %v1226 = vunpack.c.l.b16 %v326
    %v1227 = vunpack.c.l.b16 %v327
    %v1228 = vunpack.c.l.b16 %v328
    %v1229 = vunpack.c.l.b16 %v329
    %v1230 = vunpack.c.l.b16 %v330
    %v1231 = vunpack.c.l.b16 %v331
    %v1232 = vunpack.c.l.b16 %v332
    %v1233 = vunpack.c.l.b16 %v333
    %v1234 = vunpack.c.l.b16 %v334
    %v1235 = vunpack.c.l.b16 %v335
    %v1236 = vunpack.c.l.b16 %v336
    %v1237 = vunpack.c.l.b16 %v337
    %v1238 = vunpack.c.l.b16 %v338
    %v1239 = vunpack.c.l.b16 %v339
    %v1240 = vunpack.c.l.b16 %v340
    %v1241 = vunpack.c.l.b16 %v341
    %v1242 = vunpack.c.l.b16 %v342
    %v1243 = vunpack.c.l.b16 %v343
    %v1244 = vunpack.c.l.b16 %v344
    %v1245 = vunpack.c.l.b16 %v345
    %v1246 = vunpack.c.l.b16 %v346
    %v1247 = vunpack.c.l.b16 %v347
    %v1248 = vunpack.c.l.b16 %v348
    %v1249 = vunpack.c.l.b16 %v349
    %v1250 = vunpack.c.l.b16 %v350
    %v1251 = vunpack.c.l.b16 %v351
    %v1252 = vunpack.c.l.b16 %v352
    %v1253 = vunpack.c.l.b16 %v353
    %v1254 = vunpack.c.l.b16 %v354
    %v1255 = vunpack.c.l.b16 %v355
    %v1256 = vunpack.c.l.b16 %v356
    %v1257 = vunpack.c.l.b16 %v357
    %v1258 = vunpack.c.l.b16 %v358
    %v1259 = vunpack.c.l.b16 %v359
    %v1260 = vunpack.c.l.b16 %v360
    %v1261 = vunpack.c.l.b16 %v361
    %v1262 = vunpack.c.l.b16 %v362
    %v1263 = vunpack.c.l.b16 %v363
    %v1264 = vunpack.c.l.b16 %v364
    %v1265 = vunpack.c.l.b16 %v365
    %v1266 = vunpack.c.l.b16 %v366
    %v1267 = vunpack.c.l.b16 %v367
    %v1268 = vunpack.c.l.b16 %v368
    %v1269 = vunpack.c.l.b16 %v369
    %v1270 = vunpack.c.l.b16 %v370
    %v1271 = vunpack.c.l.b16 %v371
    %v1272 = vunpack.c.l.b16 %v372
    %v1273 = vunpack.c.l.b16 %v373
    %v1274 = vunpack.c.l.b16 %v374
    %v1275 = vunpack.c.l.b16 %v375
    %v1276 = vunpack.c.l.b16 %v376
    %v1277 = vunpack.c.l.b16 %v377
    %v1278 = vunpack.c.l.b16 %v378
    %v1279 = vunpack.c.l.b16 %v379
    %v1280 = vunpack.c.l.b16 %v380
    %v1281 = vunpack.c.l.b16 %v381
    %v1282 = vunpack.c.l.b16 %v382
    %v1283 = vunpack.c.l.b16 %v383
    %v1284 = vunpack.c.l.b16 %v384
    %v1285 = vunpack.c.l.b16 %v385
    %v1286 = vunpack.c.l.b16 %v386
    %v1287 = vunpack.c.l.b16 %v387
    %v1288 = vunpack.c.l.b16 %v388
    %v1289 = vunpack.c.l.b16 %v389
    %v1290 = vunpack.c.l.b16 %v390
    %v1291 = vunpack.c.l.b16 %v391
    %v1292 = vunpack.c.l.b16 %v392
    %v1293 = vunpack.c.l.b16 %v393
    %v1294 = vunpack.c.l.b16 %v394
    %v1295 = vunpack.c.l.b16 %v395
    %v1296 = vunpack.c.l.b16 %v396
    %v1297 = vunpack.c.l.b16 %v397
    %v1298 = vunpack.c.l.b16 %v398
    %v1299 = vunpack.c.l.b16 %v399
    %v1300 = vunpack.c.l.b16 %v400
    %v1301 = vunpack.c.l.b16 %v401
    %v1302 = vunpack.c.l.b16 %v402
    %v1303 = vunpack.c.l.b16 %v403
    %v1304 = vunpack.c.l.b16 %v404
    %v1305 = vunpack.c.l.b16 %v405
    %v1306 = vunpack.c.l.b16 %v406
    %v1307 = vunpack.c.l.b16 %v407
    %v1308 = vunpack.c.l.b16 %v408
    %v1309 = vunpack.c.l.b16 %v409
    %v1310 = vunpack.c.l.b16 %v410
    %v1311 = vunpack.c.l.b16 %v411
    %v1312 = vunpack.c.l.b16 %v412
    %v1313 = vunpack.c.l.b16 %v413
    %v1314 = vunpack.c.l.b16 %v414
    %v1315 = vunpack.c.l.b16 %v415
    %v1316 = vunpack.c.l.b16 %v416
    %v1317 = vunpack.c.l.b16 %v417
    %v1318 = vunpack.c.l.b16 %v418
    %v1319 = vunpack.c.l.b16 %v419
    %v1320 = vunpack.c.l.b16 %v420
    %v1321 = vunpack.c.l.b16 %v421
    %v1322 = vunpack.c.l.b16 %v422
    %v1323 = vunpack.c.l.b16 %v423
    %v1324 = vunpack.c.l.b16 %v424
    %v1325 = vunpack.c.l.b16 %v425
    %v1326 = vunpack.c.l.b16 %v426
    %v1327 = vunpack.c.l.b16 %v427
    %v1328 = vunpack.c.l.b16 %v428
    %v1329 = vpack.c.b16 %v946, %v945
    %v1330 = vpack.c.b16 %v948, %v947
    %v1331 = vpack.c.b16 %v950, %v949
    %v1332 = vpack.c.b16 %v952, %v951
    %v1333 = vpack.c.b16 %v954, %v953
    %v1334 = vpack.c.b16 %v956, %v955
    %v1335 = vpack.c.b16 %v958, %v957
    %v1336 = vpack.c.b16 %v960, %v959
    %v1337 = vpack.c.b16 %v962, %v961
    %v1338 = vpack.c.b16 %v964, %v963
    %v1339 = vpack.c.b16 %v966, %v965
    %v1340 = vpack.c.b16 %v968, %v967
    %v1341 = vpack.c.b16 %v970, %v969
    %v1342 = vpack.c.b16 %v972, %v971
    %v1343 = vpack.c.b16 %v974, %v973
    %v1344 = vpack.c.b16 %v976, %v975
    %v1345 = vpack.c.b16 %v978, %v977
    %v1346 = vpack.c.b16 %v980, %v979
    %v1347 = vpack.c.b16 %v982, %v981
    %v1348 = vpack.c.b16 %v984, %v983
    %v1349 = vpack.c.b16 %v986, %v985
    %v1350 = vpack.c.b16 %v988, %v987
    %v1351 = vpack.c.b16 %v990, %v989
    %v1352 = vpack.c.b16 %v992, %v991
    %v1353 = vpack.c.b16 %v994, %v993
    %v1354 = vpack.c.b16 %v996, %v995
    %v1355 = vpack.c.b16 %v998, %v997
    %v1356 = vpack.c.b16 %v1000, %v999
    %v1357 = vpack.c.b16 %v1002, %v1001
    %v1358 = vpack.c.b16 %v1004, %v1003
    %v1359 = vpack.c.b16 %v1006, %v1005
    %v1360 = vpack.c.b16 %v1008, %v1007
    %v1361 = vpack.c.b16 %v1010, %v1009
    %v1362 = vpack.c.b16 %v1012, %v1011
    %v1363 = vpack.c.b16 %v1014, %v1013
    %v1364 = vpack.c.b16 %v1016, %v1015
    %v1365 = vpack.c.b16 %v1018, %v1017
    %v1366 = vpack.c.b16 %v1020, %v1019
    %v1367 = vpack.c.b16 %v1022, %v1021
    %v1368 = vpack.c.b16 %v1024, %v1023
    %v1369 = vpack.c.b16 %v1026, %v1025
    %v1370 = vpack.c.b16 %v1028, %v1027
    %v1371 = vpack.c.b16 %v1030, %v1029
    %v1372 = vpack.c.b16 %v1032, %v1031
    %v1373 = vpack.c.b16 %v1034, %v1033
    %v1374 = vpack.c.b16 %v1036, %v1035
    %v1375 = vpack.c.b16 %v1038, %v1037
    %v1376 = vpack.c.b16 %v1040, %v1039
    %v1377 = vpack.c.b16 %v1042, %v1041
    %v1378 = vpack.c.b16 %v1044, %v1043
    %v1379 = vpack.c.b16 %v1046, %v1045
    %v1380 = vpack.c.b16 %v1048, %v1047
    %v1381 = vpack.c.b16 %v1050, %v1049
    %v1382 = vpack.c.b16 %v1052, %v1051
    %v1383 = vpack.c.b16 %v1054, %v1053
    %v1384 = vpack.c.b16 %v1056, %v1055
    %v1385 = vpack.c.b16 %v1058, %v1057
    %v1386 = vpack.c.b16 %v1060, %v1059
    %v1387 = vpack.c.b16 %v1062, %v1061
    %v1388 = vpack.c.b16 %v1064, %v1063
    %v1389 = vpack.c.b16 %v1066, %v1065
    %v1390 = vpack.c.b16 %v1068, %v1067
    %v1391 = vpack.c.b16 %v1070, %v1069
    %v1392 = vpack.c.b16 %v1072, %v1071
    %v1393 = vpack.c.b16 %v1074, %v1073
    %v1394 = vpack.c.b16 %v1076, %v1075
    %v1395 = vpack.c.b16 %v1078, %v1077
    %v1396 = vpack.c.b16 %v1080, %v1079
    %v1397 = vpack.c.b16 %v1082, %v1081
    %v1398 = vpack.c.b16 %v1084, %v1083
    %v1399 = vpack.c.b16 %v1086, %v1085
    %v1400 = vpack.c.b16 %v1088, %v1087
    %v1401 = vpack.c.b16 %v1090, %v1089
    %v1402 = vpack.c.b16 %v1092, %v1091
    %v1403 = vpack.c.b16 %v1094, %v1093
    %v1404 = vpack.c.b16 %v1096, %v1095
    %v1405 = vpack.c.b16 %v1098, %v1097
    %v1406 = vpack.c.b16 %v1100, %v1099
    %v1407 = vpack.c.b16 %v1102, %v1101
    %v1408 = vpack.c.b16 %v1104, %v1103
    %v1409 = vpack.c.b16 %v1106, %v1105
    %v1410 = vpack.c.b16 %v1108, %v1107
    %v1411 = vpack.c.b16 %v1110, %v1109
    %v1412 = vpack.c.b16 %v1112, %v1111
    %v1413 = vpack.c.b16 %v1114, %v1113
    %v1414 = vpack.c.b16 %v1116, %v1115
    %v1415 = vpack.c.b16 %v1118, %v1117
    %v1416 = vpack.c.b16 %v1120, %v1119
    %v1417 = vpack.c.b16 %v1122, %v1121
    %v1418 = vpack.c.b16 %v1124, %v1123
    %v1419 = vpack.c.b16 %v1126, %v1125
    %v1420 = vpack.c.b16 %v1128, %v1127
    %v1421 = vpack.c.b16 %v1130, %v1129
    %v1422 = vpack.c.b16 %v1132, %v1131
    %v1423 = vpack.c.b16 %v1134, %v1133
    %v1424 = vpack.c.b16 %v1136, %v1135
    %v1425 = vpack.c.b16 %v1138, %v1137
    %v1426 = vpack.c.b16 %v1140, %v1139
    %v1427 = vpack.c.b16 %v1142, %v1141
    %v1428 = vpack.c.b16 %v1144, %v1143
    %v1429 = vpack.c.b16 %v1146, %v1145
    %v1430 = vpack.c.b16 %v1148, %v1147
    %v1431 = vpack.c.b16 %v1150, %v1149
    %v1432 = vpack.c.b16 %v1152, %v1151
    %v1433 = vpack.c.b16 %v1154, %v1153
    %v1434 = vpack.c.b16 %v1156, %v1155
    %v1435 = vpack.c.b16 %v1158, %v1157
    %v1436 = vpack.c.b16 %v1160, %v1159
    %v1437 = vpack.c.b16 %v1162, %v1161
    %v1438 = vpack.c.b16 %v1164, %v1163
    %v1439 = vpack.c.b16 %v1166, %v1165
    %v1440 = vpack.c.b16 %v1168, %v1167
    %v1441 = vpack.c.b16 %v1170, %v1169
    %v1442 = vpack.c.b16 %v1172, %v1171
    %v1443 = vpack.c.b16 %v1174, %v1173
    %v1444 = vpack.c.b16 %v1176, %v1175
    %v1445 = vpack.c.b16 %v1178, %v1177
    %v1446 = vpack.c.b16 %v1180, %v1179
    %v1447 = vpack.c.b16 %v1182, %v1181
    %v1448 = vpack.c.b16 %v1184, %v1183
    %v1449 = vpack.c.b16 %v1186, %v1185
    %v1450 = vpack.c.b16 %v1188, %v1187
    %v1451 = vpack.c.b16 %v1190, %v1189
    %v1452 = vpack.c.b16 %v1192, %v1191
    %v1453 = vpack.c.b16 %v1194, %v1193
    %v1454 = vpack.c.b16 %v1196, %v1195
    %v1455 = vpack.c.b16 %v1198, %v1197
    %v1456 = vpack.c.b16 %v1200, %v1199
    %v1457 = vpack.c.b16 %v1202, %v1201
    %v1458 = vpack.c.b16 %v1204, %v1203
    %v1459 = vpack.c.b16 %v1206, %v1205
    %v1460 = vpack.c.b16 %v1208, %v1207
    %v1461 = vpack.c.b16 %v1210, %v1209
    %v1462 = vpack.c.b16 %v1212, %v1211
    %v1463 = vpack.c.b16 %v1214, %v1213
    %v1464 = vpack.c.b16 %v1216, %v1215
    %v1465 = vpack.c.b16 %v1218, %v1217
    %v1466 = vpack.c.b16 %v1220, %v1219
    %v1467 = vpack.c.b16 %v1222, %v1221
    %v1468 = vpack.c.b16 %v1224, %v1223
    %v1469 = vpack.c.b16 %v1226, %v1225
    %v1470 = vpack.c.b16 %v1228, %v1227
    %v1471 = vpack.c.b16 %v1230, %v1229
    %v1472 = vpack.c.b16 %v1232, %v1231
    %v1473 = vpack.c.b16 %v1234, %v1233
    %v1474 = vpack.c.b16 %v1236, %v1235
    %v1475 = vpack.c.b16 %v1238, %v1237
    %v1476 = vpack.c.b16 %v1240, %v1239
    %v1477 = vpack.c.b16 %v1242, %v1241
    %v1478 = vpack.c.b16 %v1244, %v1243
    %v1479 = vpack.c.b16 %v1246, %v1245
    %v1480 = vpack.c.b16 %v1248, %v1247
    %v1481 = vpack.c.b16 %v1250, %v1249
    %v1482 = vpack.c.b16 %v1252, %v1251
    %v1483 = vpack.c.b16 %v1254, %v1253
    %v1484 = vpack.c.b16 %v1256, %v1255
    %v1485 = vpack.c.b16 %v1258, %v1257
    %v1486 = vpack.c.b16 %v1260, %v1259
    %v1487 = vpack.c.b16 %v1262, %v1261
    %v1488 = vpack.c.b16 %v1264, %v1263
    %v1489 = vpack.c.b16 %v1266, %v1265
    %v1490 = vpack.c.b16 %v1268, %v1267
    %v1491 = vpack.c.b16 %v1270, %v1269
    %v1492 = vpack.c.b16 %v1272, %v1271
    %v1493 = vpack.c.b16 %v1274, %v1273
    %v1494 = vpack.c.b16 %v1276, %v1275
    %v1495 = vpack.c.b16 %v1278, %v1277
    %v1496 = vpack.c.b16 %v1280, %v1279
    %v1497 = vpack.c.b16 %v1282, %v1281
    %v1498 = vpack.c.b16 %v1284, %v1283
    %v1499 = vpack.c.b16 %v1286, %v1285
    %v1500 = vpack.c.b16 %v1288, %v1287
    %v1501 = vpack.c.b16 %v1290, %v1289
    %v1502 = vpack.c.b16 %v1292, %v1291
    %v1503 = vpack.c.b16 %v1294, %v1293
    %v1504 = vpack.c.b16 %v1296, %v1295
    %v1505 = vpack.c.b16 %v1298, %v1297
    %v1506 = vpack.c.b16 %v1300, %v1299
    %v1507 = vpack.c.b16 %v1302, %v1301
    %v1508 = vpack.c.b16 %v1304, %v1303
    %v1509 = vpack.c.b16 %v1306, %v1305
    %v1510 = vpack.c.b16 %v1308, %v1307
    %v1511 = vpack.c.b16 %v1310, %v1309
    %v1512 = vpack.c.b16 %v1312, %v1311
    %v1513 = vpack.c.b16 %v1314, %v1313
    %v1514 = vpack.c.b16 %v1316, %v1315
    %v1515 = vpack.c.b16 %v1318, %v1317
    %v1516 = vpack.c.b16 %v1320, %v1319
    %v1517 = vpack.c.b16 %v1322, %v1321
    %v1518 = vpack.c.b16 %v1324, %v1323
    %v1519 = vpack.c.b16 %v1326, %v1325
    %v1520 = vpack.c.b16 %v1328, %v1327
    %1713 = vmatprep.subr.bf16.mxu0 0
    %1714 = vmatpush1.bf16.msra.mxu0 %v1336
    %1715 = vmatprep.subr.bf16.mxu0 0
    %1716 = vmatpush1.bf16.msra.mxu0 %v1335
    %1717 = vmatprep.subr.bf16.mxu0 0
    %1718 = vmatpush1.bf16.msra.mxu0 %v1334
    %1719 = vmatprep.subr.bf16.mxu0 0
    %1720 = vmatpush1.bf16.msra.mxu0 %v1333
    %1721 = vmatprep.subr.bf16.mxu0 0
    %1722 = vmatpush1.bf16.msra.mxu0 %v1332
    %1723 = vmatprep.subr.bf16.mxu0 0
    %1724 = vmatpush1.bf16.msra.mxu0 %v1331
    %1725 = vmatprep.subr.bf16.mxu0 0
    %1726 = vmatpush1.bf16.msra.mxu0 %v1330
    %1727 = vmatprep.subr.bf16.mxu0 0
    %1728 = vmatpush1.bf16.msra.mxu0 %v1329
    %1729 = vmatprep.subr.bf16.mxu0 0
    %1730 = vmatpush2.bf16.msra.mxu0 %v1344
    %1731 = vmatprep.subr.bf16.mxu0 0
    %1732 = vmatpush2.bf16.msra.mxu0 %v1343
    %1733 = vmatprep.subr.bf16.mxu0 0
    %1734 = vmatpush2.bf16.msra.mxu0 %v1342
    %1735 = vmatprep.subr.bf16.mxu0 0
    %1736 = vmatpush2.bf16.msra.mxu0 %v1341
    %1737 = vmatprep.subr.bf16.mxu0 0
    %1738 = vmatpush2.bf16.msra.mxu0 %v1340
    %1739 = vmatprep.subr.bf16.mxu0 0
    %1740 = vmatpush2.bf16.msra.mxu0 %v1339
    %1741 = vmatprep.subr.bf16.mxu0 0
    %1742 = vmatpush2.bf16.msra.mxu0 %v1338
    %1743 = vmatprep.subr.bf16.mxu0 0
    %1744 = vmatpush2.bf16.msra.mxu0 %v1337
    %1745 = vmatprep.mubr.bf16.mxu0 %v450
    %1746 = vmatmul.mubr.bf16.gmra.mxu0 %v442
    %v1747 = vpop.f32.mrf.mxu0
    %v1748 = vadd.f32 0.0, %v1747
    %v1749 = vpop.f32.mrf.mxu0
    %v1750 = vpop.f32.mrf.mxu0
    %v1751 = vpop.f32.mrf.mxu0
    %1752 = vdwg.mxu0
    %1753 = vmatprep.subr.bf16.mxu0 0
    %1754 = vmatpush1.bf16.msra.mxu0 %v1352
    %1755 = vmatprep.subr.bf16.mxu0 0
    %1756 = vmatpush1.bf16.msra.mxu0 %v1351
    %1757 = vmatprep.subr.bf16.mxu0 0
    %1758 = vmatpush1.bf16.msra.mxu0 %v1350
    %1759 = vmatprep.subr.bf16.mxu0 0
    %1760 = vmatpush1.bf16.msra.mxu0 %v1349
    %1761 = vmatprep.subr.bf16.mxu0 0
    %1762 = vmatpush1.bf16.msra.mxu0 %v1348
    %1763 = vmatprep.subr.bf16.mxu0 0
    %1764 = vmatpush1.bf16.msra.mxu0 %v1347
    %1765 = vmatprep.subr.bf16.mxu0 0
    %1766 = vmatpush1.bf16.msra.mxu0 %v1346
    %1767 = vmatprep.subr.bf16.mxu0 0
    %1768 = vmatpush1.bf16.msra.mxu0 %v1345
    %1769 = vmatprep.subr.bf16.mxu0 0
    %1770 = vmatpush2.bf16.msra.mxu0 %v1360
    %1771 = vmatprep.subr.bf16.mxu0 0
    %1772 = vmatpush2.bf16.msra.mxu0 %v1359
    %1773 = vmatprep.subr.bf16.mxu0 0
    %1774 = vmatpush2.bf16.msra.mxu0 %v1358
    %1775 = vmatprep.subr.bf16.mxu0 0
    %1776 = vmatpush2.bf16.msra.mxu0 %v1357
    %1777 = vmatprep.subr.bf16.mxu0 0
    %1778 = vmatpush2.bf16.msra.mxu0 %v1356
    %1779 = vmatprep.subr.bf16.mxu0 0
    %1780 = vmatpush2.bf16.msra.mxu0 %v1355
    %1781 = vmatprep.subr.bf16.mxu0 0
    %1782 = vmatpush2.bf16.msra.mxu0 %v1354
    %1783 = vmatprep.subr.bf16.mxu0 0
    %1784 = vmatpush2.bf16.msra.mxu0 %v1353
    %1785 = vmatprep.mubr.bf16.mxu0 %v451
    %1786 = vmatmul.mubr.bf16.gmra.mxu0 %v449
    %v1787 = vpop.f32.mrf.mxu0
    %v1788 = vadd.f32 %v1748, %v1787
    %v1789 = vpop.f32.mrf.mxu0
    %v1790 = vpop.f32.mrf.mxu0
    %v1791 = vpop.f32.mrf.mxu0
    %1792 = vdwg.mxu0
    %1793 = vmatprep.subr.bf16.mxu0 0
    %1794 = vmatpush1.bf16.msra.mxu0 %v1368
    %1795 = vmatprep.subr.bf16.mxu0 0
    %1796 = vmatpush1.bf16.msra.mxu0 %v1367
    %1797 = vmatprep.subr.bf16.mxu0 0
    %1798 = vmatpush1.bf16.msra.mxu0 %v1366
    %1799 = vmatprep.subr.bf16.mxu0 0
    %1800 = vmatpush1.bf16.msra.mxu0 %v1365
    %1801 = vmatprep.subr.bf16.mxu0 0
    %1802 = vmatpush1.bf16.msra.mxu0 %v1364
    %1803 = vmatprep.subr.bf16.mxu0 0
    %1804 = vmatpush1.bf16.msra.mxu0 %v1363
    %1805 = vmatprep.subr.bf16.mxu0 0
    %1806 = vmatpush1.bf16.msra.mxu0 %v1362
    %1807 = vmatprep.subr.bf16.mxu0 0
    %1808 = vmatpush1.bf16.msra.mxu0 %v1361
    %1809 = vmatprep.subr.bf16.mxu0 0
    %1810 = vmatpush2.bf16.msra.mxu0 %v1376
    %1811 = vmatprep.subr.bf16.mxu0 0
    %1812 = vmatpush2.bf16.msra.mxu0 %v1375
    %1813 = vmatprep.subr.bf16.mxu0 0
    %1814 = vmatpush2.bf16.msra.mxu0 %v1374
    %1815 = vmatprep.subr.bf16.mxu0 0
    %1816 = vmatpush2.bf16.msra.mxu0 %v1373
    %1817 = vmatprep.subr.bf16.mxu0 0
    %1818 = vmatpush2.bf16.msra.mxu0 %v1372
    %1819 = vmatprep.subr.bf16.mxu0 0
    %1820 = vmatpush2.bf16.msra.mxu0 %v1371
    %1821 = vmatprep.subr.bf16.mxu0 0
    %1822 = vmatpush2.bf16.msra.mxu0 %v1370
    %1823 = vmatprep.subr.bf16.mxu0 0
    %1824 = vmatpush2.bf16.msra.mxu0 %v1369
    %1825 = vmatprep.mubr.bf16.mxu0 %v467
    %1826 = vmatmul.mubr.bf16.gmra.mxu0 %v459
    %v1827 = vpop.f32.mrf.mxu0
    %v1828 = vadd.f32 %v1788, %v1827
    %v1829 = vpop.f32.mrf.mxu0
    %v1830 = vpop.f32.mrf.mxu0
    %v1831 = vpop.f32.mrf.mxu0
    %1832 = vdwg.mxu0
    %1833 = vmatprep.subr.bf16.mxu0 0
    %1834 = vmatpush1.bf16.msra.mxu0 %v1384
    %1835 = vmatprep.subr.bf16.mxu0 0
    %1836 = vmatpush1.bf16.msra.mxu0 %v1383
    %1837 = vmatprep.subr.bf16.mxu0 0
    %1838 = vmatpush1.bf16.msra.mxu0 %v1382
    %1839 = vmatprep.subr.bf16.mxu0 0
    %1840 = vmatpush1.bf16.msra.mxu0 %v1381
    %1841 = vmatprep.subr.bf16.mxu0 0
    %1842 = vmatpush1.bf16.msra.mxu0 %v1380
    %1843 = vmatprep.subr.bf16.mxu0 0
    %1844 = vmatpush1.bf16.msra.mxu0 %v1379
    %1845 = vmatprep.subr.bf16.mxu0 0
    %1846 = vmatpush1.bf16.msra.mxu0 %v1378
    %1847 = vmatprep.subr.bf16.mxu0 0
    %1848 = vmatpush1.bf16.msra.mxu0 %v1377
    %1849 = vmatprep.subr.bf16.mxu0 0
    %1850 = vmatpush2.bf16.msra.mxu0 %v1392
    %1851 = vmatprep.subr.bf16.mxu0 0
    %1852 = vmatpush2.bf16.msra.mxu0 %v1391
    %1853 = vmatprep.subr.bf16.mxu0 0
    %1854 = vmatpush2.bf16.msra.mxu0 %v1390
    %1855 = vmatprep.subr.bf16.mxu0 0
    %1856 = vmatpush2.bf16.msra.mxu0 %v1389
    %1857 = vmatprep.subr.bf16.mxu0 0
    %1858 = vmatpush2.bf16.msra.mxu0 %v1388
    %1859 = vmatprep.subr.bf16.mxu0 0
    %1860 = vmatpush2.bf16.msra.mxu0 %v1387
    %1861 = vmatprep.subr.bf16.mxu0 0
    %1862 = vmatpush2.bf16.msra.mxu0 %v1386
    %1863 = vmatprep.subr.bf16.mxu0 0
    %1864 = vmatpush2.bf16.msra.mxu0 %v1385
    %1865 = vmatprep.mubr.bf16.mxu0 %v468
    %1866 = vmatmul.mubr.bf16.gmra.mxu0 %v466
    %v1867 = vpop.f32.mrf.mxu0
    %v1868 = vadd.f32 %v1828, %v1867
    %v1869 = vpop.f32.mrf.mxu0
    %v1870 = vpop.f32.mrf.mxu0
    %v1871 = vpop.f32.mrf.mxu0
    %1872 = vdwg.mxu0
    %1873 = vmatprep.subr.bf16.mxu0 0
    %1874 = vmatpush1.bf16.msra.mxu0 %v1400
    %1875 = vmatprep.subr.bf16.mxu0 0
    %1876 = vmatpush1.bf16.msra.mxu0 %v1399
    %1877 = vmatprep.subr.bf16.mxu0 0
    %1878 = vmatpush1.bf16.msra.mxu0 %v1398
    %1879 = vmatprep.subr.bf16.mxu0 0
    %1880 = vmatpush1.bf16.msra.mxu0 %v1397
    %1881 = vmatprep.subr.bf16.mxu0 0
    %1882 = vmatpush1.bf16.msra.mxu0 %v1396
    %1883 = vmatprep.subr.bf16.mxu0 0
    %1884 = vmatpush1.bf16.msra.mxu0 %v1395
    %1885 = vmatprep.subr.bf16.mxu0 0
    %1886 = vmatpush1.bf16.msra.mxu0 %v1394
    %1887 = vmatprep.subr.bf16.mxu0 0
    %1888 = vmatpush1.bf16.msra.mxu0 %v1393
    %1889 = vmatprep.subr.bf16.mxu0 0
    %1890 = vmatpush2.bf16.msra.mxu0 %v1408
    %1891 = vmatprep.subr.bf16.mxu0 0
    %1892 = vmatpush2.bf16.msra.mxu0 %v1407
    %1893 = vmatprep.subr.bf16.mxu0 0
    %1894 = vmatpush2.bf16.msra.mxu0 %v1406
    %1895 = vmatprep.subr.bf16.mxu0 0
    %1896 = vmatpush2.bf16.msra.mxu0 %v1405
    %1897 = vmatprep.subr.bf16.mxu0 0
    %1898 = vmatpush2.bf16.msra.mxu0 %v1404
    %1899 = vmatprep.subr.bf16.mxu0 0
    %1900 = vmatpush2.bf16.msra.mxu0 %v1403
    %1901 = vmatprep.subr.bf16.mxu0 0
    %1902 = vmatpush2.bf16.msra.mxu0 %v1402
    %1903 = vmatprep.subr.bf16.mxu0 0
    %1904 = vmatpush2.bf16.msra.mxu0 %v1401
    %1905 = vmatprep.mubr.bf16.mxu0 %v484
    %1906 = vmatmul.mubr.bf16.gmra.mxu0 %v476
    %v1907 = vpop.f32.mrf.mxu0
    %v1908 = vadd.f32 %v1868, %v1907
    %v1909 = vpop.f32.mrf.mxu0
    %v1910 = vpop.f32.mrf.mxu0
    %v1911 = vpop.f32.mrf.mxu0
    %1912 = vdwg.mxu0
    %1913 = vmatprep.subr.bf16.mxu0 0
    %1914 = vmatpush1.bf16.msra.mxu0 %v1416
    %1915 = vmatprep.subr.bf16.mxu0 0
    %1916 = vmatpush1.bf16.msra.mxu0 %v1415
    %1917 = vmatprep.subr.bf16.mxu0 0
    %1918 = vmatpush1.bf16.msra.mxu0 %v1414
    %1919 = vmatprep.subr.bf16.mxu0 0
    %1920 = vmatpush1.bf16.msra.mxu0 %v1413
    %1921 = vmatprep.subr.bf16.mxu0 0
    %1922 = vmatpush1.bf16.msra.mxu0 %v1412
    %1923 = vmatprep.subr.bf16.mxu0 0
    %1924 = vmatpush1.bf16.msra.mxu0 %v1411
    %1925 = vmatprep.subr.bf16.mxu0 0
    %1926 = vmatpush1.bf16.msra.mxu0 %v1410
    %1927 = vmatprep.subr.bf16.mxu0 0
    %1928 = vmatpush1.bf16.msra.mxu0 %v1409
    %1929 = vmatprep.subr.bf16.mxu0 0
    %1930 = vmatpush2.bf16.msra.mxu0 %v1424
    %1931 = vmatprep.subr.bf16.mxu0 0
    %1932 = vmatpush2.bf16.msra.mxu0 %v1423
    %1933 = vmatprep.subr.bf16.mxu0 0
    %1934 = vmatpush2.bf16.msra.mxu0 %v1422
    %1935 = vmatprep.subr.bf16.mxu0 0
    %1936 = vmatpush2.bf16.msra.mxu0 %v1421
    %1937 = vmatprep.subr.bf16.mxu0 0
    %1938 = vmatpush2.bf16.msra.mxu0 %v1420
    %1939 = vmatprep.subr.bf16.mxu0 0
    %1940 = vmatpush2.bf16.msra.mxu0 %v1419
    %1941 = vmatprep.subr.bf16.mxu0 0
    %1942 = vmatpush2.bf16.msra.mxu0 %v1418
    %1943 = vmatprep.subr.bf16.mxu0 0
    %1944 = vmatpush2.bf16.msra.mxu0 %v1417
    %1945 = vmatprep.mubr.bf16.mxu0 %v485
    %1946 = vmatmul.mubr.bf16.gmra.mxu0 %v483
    %v1947 = vpop.f32.mrf.mxu0
    %v1948 = vadd.f32 %v1908, %v1947
    %v1949 = vpop.f32.mrf.mxu0
    %v1950 = vpop.f32.mrf.mxu0
    %v1951 = vpop.f32.mrf.mxu0
    %1952 = vdwg.mxu0
    %1953 = vmatprep.subr.bf16.mxu0 0
    %1954 = vmatpush1.bf16.msra.mxu0 %v1432
    %1955 = vmatprep.subr.bf16.mxu0 0
    %1956 = vmatpush1.bf16.msra.mxu0 %v1431
    %1957 = vmatprep.subr.bf16.mxu0 0
    %1958 = vmatpush1.bf16.msra.mxu0 %v1430
    %1959 = vmatprep.subr.bf16.mxu0 0
    %1960 = vmatpush1.bf16.msra.mxu0 %v1429
    %1961 = vmatprep.subr.bf16.mxu0 0
    %1962 = vmatpush1.bf16.msra.mxu0 %v1428
    %1963 = vmatprep.subr.bf16.mxu0 0
    %1964 = vmatpush1.bf16.msra.mxu0 %v1427
    %1965 = vmatprep.subr.bf16.mxu0 0
    %1966 = vmatpush1.bf16.msra.mxu0 %v1426
    %1967 = vmatprep.subr.bf16.mxu0 0
    %1968 = vmatpush1.bf16.msra.mxu0 %v1425
    %1969 = vmatprep.subr.bf16.mxu0 0
    %1970 = vmatpush2.bf16.msra.mxu0 %v1440
    %1971 = vmatprep.subr.bf16.mxu0 0
    %1972 = vmatpush2.bf16.msra.mxu0 %v1439
    %1973 = vmatprep.subr.bf16.mxu0 0
    %1974 = vmatpush2.bf16.msra.mxu0 %v1438
    %1975 = vmatprep.subr.bf16.mxu0 0
    %1976 = vmatpush2.bf16.msra.mxu0 %v1437
    %1977 = vmatprep.subr.bf16.mxu0 0
    %1978 = vmatpush2.bf16.msra.mxu0 %v1436
    %1979 = vmatprep.subr.bf16.mxu0 0
    %1980 = vmatpush2.bf16.msra.mxu0 %v1435
    %1981 = vmatprep.subr.bf16.mxu0 0
    %1982 = vmatpush2.bf16.msra.mxu0 %v1434
    %1983 = vmatprep.subr.bf16.mxu0 0
    %1984 = vmatpush2.bf16.msra.mxu0 %v1433
    %1985 = vmatprep.mubr.bf16.mxu0 %v501
    %1986 = vmatmul.mubr.bf16.gmra.mxu0 %v493
    %v1987 = vpop.f32.mrf.mxu0
    %v1988 = vadd.f32 %v1948, %v1987
    %v1989 = vpop.f32.mrf.mxu0
    %v1990 = vpop.f32.mrf.mxu0
    %v1991 = vpop.f32.mrf.mxu0
    %1992 = vdwg.mxu0
    %1993 = vmatprep.subr.bf16.mxu0 0
    %1994 = vmatpush1.bf16.msra.mxu0 %v1448
    %1995 = vmatprep.subr.bf16.mxu0 0
    %1996 = vmatpush1.bf16.msra.mxu0 %v1447
    %1997 = vmatprep.subr.bf16.mxu0 0
    %1998 = vmatpush1.bf16.msra.mxu0 %v1446
    %1999 = vmatprep.subr.bf16.mxu0 0
    %2000 = vmatpush1.bf16.msra.mxu0 %v1445
    %2001 = vmatprep.subr.bf16.mxu0 0
    %2002 = vmatpush1.bf16.msra.mxu0 %v1444
    %2003 = vmatprep.subr.bf16.mxu0 0
    %2004 = vmatpush1.bf16.msra.mxu0 %v1443
    %2005 = vmatprep.subr.bf16.mxu0 0
    %2006 = vmatpush1.bf16.msra.mxu0 %v1442
    %2007 = vmatprep.subr.bf16.mxu0 0
    %2008 = vmatpush1.bf16.msra.mxu0 %v1441
    %2009 = vmatprep.subr.bf16.mxu0 0
    %2010 = vmatpush2.bf16.msra.mxu0 %v1456
    %2011 = vmatprep.subr.bf16.mxu0 0
    %2012 = vmatpush2.bf16.msra.mxu0 %v1455
    %2013 = vmatprep.subr.bf16.mxu0 0
    %2014 = vmatpush2.bf16.msra.mxu0 %v1454
    %2015 = vmatprep.subr.bf16.mxu0 0
    %2016 = vmatpush2.bf16.msra.mxu0 %v1453
    %2017 = vmatprep.subr.bf16.mxu0 0
    %2018 = vmatpush2.bf16.msra.mxu0 %v1452
    %2019 = vmatprep.subr.bf16.mxu0 0
    %2020 = vmatpush2.bf16.msra.mxu0 %v1451
    %2021 = vmatprep.subr.bf16.mxu0 0
    %2022 = vmatpush2.bf16.msra.mxu0 %v1450
    %2023 = vmatprep.subr.bf16.mxu0 0
    %2024 = vmatpush2.bf16.msra.mxu0 %v1449
    %2025 = vmatprep.mubr.bf16.mxu0 %v502
    %2026 = vmatmul.mubr.bf16.gmra.mxu0 %v500
    %v2027 = vpop.f32.mrf.mxu0
    %v2028 = vadd.f32 %v1988, %v2027
    %v2029 = vpop.f32.mrf.mxu0
    %v2030 = vpop.f32.mrf.mxu0
    %v2031 = vpop.f32.mrf.mxu0
    %2032 = vdwg.mxu0
    %2033 = vmatprep.subr.bf16.mxu0 0
    %2034 = vmatpush1.bf16.msra.mxu0 %v1464
    %2035 = vmatprep.subr.bf16.mxu0 0
    %2036 = vmatpush1.bf16.msra.mxu0 %v1463
    %2037 = vmatprep.subr.bf16.mxu0 0
    %2038 = vmatpush1.bf16.msra.mxu0 %v1462
    %2039 = vmatprep.subr.bf16.mxu0 0
    %2040 = vmatpush1.bf16.msra.mxu0 %v1461
    %2041 = vmatprep.subr.bf16.mxu0 0
    %2042 = vmatpush1.bf16.msra.mxu0 %v1460
    %2043 = vmatprep.subr.bf16.mxu0 0
    %2044 = vmatpush1.bf16.msra.mxu0 %v1459
    %2045 = vmatprep.subr.bf16.mxu0 0
    %2046 = vmatpush1.bf16.msra.mxu0 %v1458
    %2047 = vmatprep.subr.bf16.mxu0 0
    %2048 = vmatpush1.bf16.msra.mxu0 %v1457
    %2049 = vmatprep.subr.bf16.mxu0 0
    %2050 = vmatpush2.bf16.msra.mxu0 %v1472
    %2051 = vmatprep.subr.bf16.mxu0 0
    %2052 = vmatpush2.bf16.msra.mxu0 %v1471
    %2053 = vmatprep.subr.bf16.mxu0 0
    %2054 = vmatpush2.bf16.msra.mxu0 %v1470
    %2055 = vmatprep.subr.bf16.mxu0 0
    %2056 = vmatpush2.bf16.msra.mxu0 %v1469
    %2057 = vmatprep.subr.bf16.mxu0 0
    %2058 = vmatpush2.bf16.msra.mxu0 %v1468
    %2059 = vmatprep.subr.bf16.mxu0 0
    %2060 = vmatpush2.bf16.msra.mxu0 %v1467
    %2061 = vmatprep.subr.bf16.mxu0 0
    %2062 = vmatpush2.bf16.msra.mxu0 %v1466
    %2063 = vmatprep.subr.bf16.mxu0 0
    %2064 = vmatpush2.bf16.msra.mxu0 %v1465
    %2065 = vmatprep.mubr.bf16.mxu0 %v518
    %2066 = vmatmul.mubr.bf16.gmra.mxu0 %v510
    %v2067 = vpop.f32.mrf.mxu0
    %v2068 = vadd.f32 %v2028, %v2067
    %v2069 = vpop.f32.mrf.mxu0
    %v2070 = vpop.f32.mrf.mxu0
    %v2071 = vpop.f32.mrf.mxu0
    %2072 = vdwg.mxu0
    %2073 = vmatprep.subr.bf16.mxu0 0
    %2074 = vmatpush1.bf16.msra.mxu0 %v1480
    %2075 = vmatprep.subr.bf16.mxu0 0
    %2076 = vmatpush1.bf16.msra.mxu0 %v1479
    %2077 = vmatprep.subr.bf16.mxu0 0
    %2078 = vmatpush1.bf16.msra.mxu0 %v1478
    %2079 = vmatprep.subr.bf16.mxu0 0
    %2080 = vmatpush1.bf16.msra.mxu0 %v1477
    %2081 = vmatprep.subr.bf16.mxu0 0
    %2082 = vmatpush1.bf16.msra.mxu0 %v1476
    %2083 = vmatprep.subr.bf16.mxu0 0
    %2084 = vmatpush1.bf16.msra.mxu0 %v1475
    %2085 = vmatprep.subr.bf16.mxu0 0
    %2086 = vmatpush1.bf16.msra.mxu0 %v1474
    %2087 = vmatprep.subr.bf16.mxu0 0
    %2088 = vmatpush1.bf16.msra.mxu0 %v1473
    %2089 = vmatprep.subr.bf16.mxu0 0
    %2090 = vmatpush2.bf16.msra.mxu0 %v1488
    %2091 = vmatprep.subr.bf16.mxu0 0
    %2092 = vmatpush2.bf16.msra.mxu0 %v1487
    %2093 = vmatprep.subr.bf16.mxu0 0
    %2094 = vmatpush2.bf16.msra.mxu0 %v1486
    %2095 = vmatprep.subr.bf16.mxu0 0
    %2096 = vmatpush2.bf16.msra.mxu0 %v1485
    %2097 = vmatprep.subr.bf16.mxu0 0
    %2098 = vmatpush2.bf16.msra.mxu0 %v1484
    %2099 = vmatprep.subr.bf16.mxu0 0
    %2100 = vmatpush2.bf16.msra.mxu0 %v1483
    %2101 = vmatprep.subr.bf16.mxu0 0
    %2102 = vmatpush2.bf16.msra.mxu0 %v1482
    %2103 = vmatprep.subr.bf16.mxu0 0
    %2104 = vmatpush2.bf16.msra.mxu0 %v1481
    %2105 = vmatprep.mubr.bf16.mxu0 %v519
    %2106 = vmatmul.mubr.bf16.gmra.mxu0 %v517
    %v2107 = vpop.f32.mrf.mxu0
    %v2108 = vadd.f32 %v2068, %v2107
    %v2109 = vpop.f32.mrf.mxu0
    %v2110 = vpop.f32.mrf.mxu0
    %v2111 = vpop.f32.mrf.mxu0
    %2112 = vdwg.mxu0
    %2113 = vmatprep.subr.bf16.mxu0 0
    %2114 = vmatpush1.bf16.msra.mxu0 %v1496
    %2115 = vmatprep.subr.bf16.mxu0 0
    %2116 = vmatpush1.bf16.msra.mxu0 %v1495
    %2117 = vmatprep.subr.bf16.mxu0 0
    %2118 = vmatpush1.bf16.msra.mxu0 %v1494
    %2119 = vmatprep.subr.bf16.mxu0 0
    %2120 = vmatpush1.bf16.msra.mxu0 %v1493
    %2121 = vmatprep.subr.bf16.mxu0 0
    %2122 = vmatpush1.bf16.msra.mxu0 %v1492
    %2123 = vmatprep.subr.bf16.mxu0 0
    %2124 = vmatpush1.bf16.msra.mxu0 %v1491
    %2125 = vmatprep.subr.bf16.mxu0 0
    %2126 = vmatpush1.bf16.msra.mxu0 %v1490
    %2127 = vmatprep.subr.bf16.mxu0 0
    %2128 = vmatpush1.bf16.msra.mxu0 %v1489
    %2129 = vmatprep.subr.bf16.mxu0 0
    %2130 = vmatpush2.bf16.msra.mxu0 %v1504
    %2131 = vmatprep.subr.bf16.mxu0 0
    %2132 = vmatpush2.bf16.msra.mxu0 %v1503
    %2133 = vmatprep.subr.bf16.mxu0 0
    %2134 = vmatpush2.bf16.msra.mxu0 %v1502
    %2135 = vmatprep.subr.bf16.mxu0 0
    %2136 = vmatpush2.bf16.msra.mxu0 %v1501
    %2137 = vmatprep.subr.bf16.mxu0 0
    %2138 = vmatpush2.bf16.msra.mxu0 %v1500
    %2139 = vmatprep.subr.bf16.mxu0 0
    %2140 = vmatpush2.bf16.msra.mxu0 %v1499
    %2141 = vmatprep.subr.bf16.mxu0 0
    %2142 = vmatpush2.bf16.msra.mxu0 %v1498
    %2143 = vmatprep.subr.bf16.mxu0 0
    %2144 = vmatpush2.bf16.msra.mxu0 %v1497
    %2145 = vmatprep.mubr.bf16.mxu0 %v535
    %2146 = vmatmul.mubr.bf16.gmra.mxu0 %v527
    %v2147 = vpop.f32.mrf.mxu0
    %v2148 = vadd.f32 %v2108, %v2147
    %v2149 = vpop.f32.mrf.mxu0
    %v2150 = vpop.f32.mrf.mxu0
    %v2151 = vpop.f32.mrf.mxu0
    %2152 = vdwg.mxu0
    %2153 = vmatprep.subr.bf16.mxu0 0
    %2154 = vmatpush1.bf16.msra.mxu0 %v1512
    %2155 = vmatprep.subr.bf16.mxu0 0
    %2156 = vmatpush1.bf16.msra.mxu0 %v1511
    %2157 = vmatprep.subr.bf16.mxu0 0
    %2158 = vmatpush1.bf16.msra.mxu0 %v1510
    %2159 = vmatprep.subr.bf16.mxu0 0
    %2160 = vmatpush1.bf16.msra.mxu0 %v1509
    %2161 = vmatprep.subr.bf16.mxu0 0
    %2162 = vmatpush1.bf16.msra.mxu0 %v1508
    %2163 = vmatprep.subr.bf16.mxu0 0
    %2164 = vmatpush1.bf16.msra.mxu0 %v1507
    %2165 = vmatprep.subr.bf16.mxu0 0
    %2166 = vmatpush1.bf16.msra.mxu0 %v1506
    %2167 = vmatprep.subr.bf16.mxu0 0
    %2168 = vmatpush1.bf16.msra.mxu0 %v1505
    %2169 = vmatprep.subr.bf16.mxu0 0
    %2170 = vmatpush2.bf16.msra.mxu0 %v1520
    %2171 = vmatprep.subr.bf16.mxu0 0
    %2172 = vmatpush2.bf16.msra.mxu0 %v1519
    %2173 = vmatprep.subr.bf16.mxu0 0
    %2174 = vmatpush2.bf16.msra.mxu0 %v1518
    %2175 = vmatprep.subr.bf16.mxu0 0
    %2176 = vmatpush2.bf16.msra.mxu0 %v1517
    %2177 = vmatprep.subr.bf16.mxu0 0
    %2178 = vmatpush2.bf16.msra.mxu0 %v1516
    %2179 = vmatprep.subr.bf16.mxu0 0
    %2180 = vmatpush2.bf16.msra.mxu0 %v1515
    %2181 = vmatprep.subr.bf16.mxu0 0
    %2182 = vmatpush2.bf16.msra.mxu0 %v1514
    %2183 = vmatprep.subr.bf16.mxu0 0
    %2184 = vmatpush2.bf16.msra.mxu0 %v1513
    %2185 = vmatprep.mubr.bf16.mxu0 %v536
    %2186 = vmatmul.mubr.bf16.gmra.mxu0 %v534
    %v2187 = vpop.f32.mrf.mxu0
    %v2188 = vadd.f32 %v2148, %v2187
    %v2189 = vpop.f32.mrf.mxu0
    %v2190 = vpop.f32.mrf.mxu0
    %v2191 = vpop.f32.mrf.mxu0
    %2192 = vdwg.mxu0
    %2193 = vst [vmem:[#allocation7] sm:$0xf] %v2188
    // Predicated region
    $region18: #{tpu_custom_call.1} parent=1 // pred_check
      _
    $region19: #{tpu_custom_call.1} parent=1 // pred_check_branch
      %2195 = sbr.rel (0) target = $region21
    $region20: #{tpu_custom_call.1} parent=1 // pred_region
      %s2197 = ssub.s32 64, 64
      %2198 = vsyncadd [#allocation4], %s2197
      %s2200 = sshll.u32 [#allocation7], 4
      %s2201 = int_to_ptr.vmem [resolvable:$true] %s2200
      %2203 = dma.vmem_to_hbm [thread:$0]  %s2201, 64, %s2, [#allocation4]
    $region21: #{tpu_custom_call.1} parent=1 // pred_fallthru
      _
    // Predicated region
    $region22: #{tpu_custom_call.1} parent=1 // pred_check
      _
    $region23: #{tpu_custom_call.1} parent=1 // pred_check_branch
      %2205 = sbr.rel (0) target = $region25
    $region24: #{tpu_custom_call.1} parent=1 // pred_region
      %2206 = dma.done [#allocation4], 64
    $region25: #{tpu_custom_call.1} parent=1 // pred_fallthru
      _
    %2207 = vsyncpa [#allocation3], 1
    %2208 = vsyncpa [#allocation6], 1
    %2209 = vsyncpa [#allocation4], 1

</llo_original>
